<compile_context>
chip_gen: v5e
topology: v5e:2x2
jax: 0.10.0
libtpu: 0.0.40
codegen_flags: <defaults>
</compile_context>

<pallas_src>
import jax
import jax.numpy as jnp
from jax import lax
from jax.experimental import pallas as pl
from jax.experimental.pallas import tpu as pltpu

# ----------------------------- model config ---------------------------------
INPUT_DIMS = 4                     # feature channels
COORD_DIMS = 3                     # coordinate channels (first kNN)
NUM_CLASSES = 5
CONV_PARAMS = [(7, (32, 32, 32)), (7, (64, 64, 64))]
FC_HIDDEN = 128                    # fc_params = [(128, 0.1)]


# --------------------------- weight-slab layout ------------------------------
def _slab_offsets(din, c, align=16):
    """Row offsets of [ [w0_center|w_shortcut], w0_neighbor, w1, w2 ] in the
    packed bf16 weight slab (segment starts padded to the bf16 sublane tile)."""
    sizes = (din, din, c, c)
    offsets, off = [], 0
    for s in sizes:
        offsets.append(off)
        off += s
        off += (-off) % align
    return offsets, off


# ------------------------------ Pallas kernels -------------------------------
def _edgeconv_body(diff_ref, fts_bf, w_ref, b_ref, mask, *, K, Din, C, offs, bb, P):
    """Shared EdgeConv math: returns the masked block output (bb*P, C) f32."""
    o_cs, o_n, o_w1, o_w2 = offs
    R = bb * P

    # center + shortcut terms from ONE matmul against column-packed [w0c | wsc].
    cs = jnp.dot(fts_bf, w_ref[o_cs:o_cs + Din, :],
                 preferred_element_type=jnp.float32) + b_ref[0:1, :]
    c0 = cs[:, 0:C]                                             # (R, C)
    sc = cs[:, C:2 * C]                                         # (R, C)

    # K folded into the matmul M dimension: one matmul per conv layer.
    d = diff_ref[...].reshape(bb * K * P, Din)                  # bf16
    e = jnp.dot(d, w_ref[o_n:o_n + Din, 0:C],
                preferred_element_type=jnp.float32)             # (bb*K*P, C)
    h = jnp.maximum(e.reshape(bb, K, P, C) + c0.reshape(bb, 1, P, C), 0.0)
    h = h.reshape(bb * K * P, C).astype(jnp.bfloat16)
    h = jnp.maximum(jnp.dot(h, w_ref[o_w1:o_w1 + C, 0:C],
                            preferred_element_type=jnp.float32)
                    + b_ref[1:2, 0:C], 0.0)
    h = h.astype(jnp.bfloat16)
    h = jnp.maximum(jnp.dot(h, w_ref[o_w2:o_w2 + C, 0:C],
                            preferred_element_type=jnp.float32)
                    + b_ref[2:3, 0:C], 0.0)
    # neighbor mean: VPU sum over the major K axis, times 1/K.
    m = jnp.sum(h.reshape(bb, K, P, C), axis=1) * (1.0 / K)     # (bb, P, C)

    return jnp.maximum(sc + m.reshape(R, C), 0.0) * mask        # masked output


def make_edgeconv_kernel(K, Din, C, offs, bb, P):
    """Standalone EdgeConv block (block 0)."""
    def kernel(diff_ref, fts_ref, mask_ref, w_ref, b_ref, out_ref):
        fts_bf = fts_ref[...].astype(jnp.bfloat16)
        out_ref[...] = _edgeconv_body(diff_ref, fts_bf, w_ref, b_ref, mask_ref[...],
                                      K=K, Din=Din, C=C, offs=offs, bb=bb, P=P)
    return kernel


def make_edgeconv_head_kernel(K, Din, C, offs, bb, P, Cf, NC):
    """EdgeConv block 1 fused with fusion conv + masked pooling + FC head."""
    def kernel(diff_ref, fts_ref, mask_ref, poolw_ref, w_ref, b_ref,
               wf_ref, bf_ref, w1_ref, b1_ref, w2_ref, b2_ref, out_ref):
        fts_bf = fts_ref[...].astype(jnp.bfloat16)               # (R, Din) = out0
        out1 = _edgeconv_body(diff_ref, fts_bf, w_ref, b_ref, mask_ref[...],
                              K=K, Din=Din, C=C, offs=offs, bb=bb, P=P)

        # Fusion conv on the never-materialized concat [out0 | out1]:
        # split the fusion weight rows instead of concatenating activations.
        y = (jnp.dot(fts_bf, wf_ref[0:Din, :], preferred_element_type=jnp.float32)
             + jnp.dot(out1.astype(jnp.bfloat16), wf_ref[Din:Din + C, :],
                       preferred_element_type=jnp.float32)
             + bf_ref[...])
        y = jnp.maximum(y, 0.0)                                  # (R, Cf)

        # Masked global-average pooling (mask / count folded into poolw).
        pooled = jnp.sum((y * poolw_ref[...]).reshape(bb, P, Cf), axis=1)  # (bb, Cf)

        # FC head (Dropout = identity at inference).
        hfc = jnp.maximum(
            jnp.dot(pooled.astype(jnp.bfloat16), w1_ref[...],
                    preferred_element_type=jnp.float32) + b1_ref[...], 0.0)
        out_ref[0] = jnp.dot(hfc.astype(jnp.bfloat16), w2_ref[...],
                             preferred_element_type=jnp.float32) + b2_ref[...]
    return kernel


# ------------------------------ kernel wrappers -------------------------------
def edgeconv_block(diff, fts_flat, mask_flat, blk, *, bb, P, K, Din, C):
    B = diff.shape[0]
    nblk = B // bb
    offs, _ = _slab_offsets(Din, C)
    return pl.pallas_call(
        make_edgeconv_kernel(K, Din, C, offs, bb, P),
        out_shape=jax.ShapeDtypeStruct((B * P, C), jnp.float32),
        grid=(nblk,),
        in_specs=[
            pl.BlockSpec((bb, K, P, Din), lambda i: (i, 0, 0, 0)),   # edge diffs (bf16)
            pl.BlockSpec((bb * P, Din), lambda i: (i, 0)),           # center features
            pl.BlockSpec((bb * P, 1), lambda i: (i, 0)),             # mask
            pl.BlockSpec(blk["w"].shape, lambda i: (0, 0)),          # packed weights
            pl.BlockSpec(blk["b"].shape, lambda i: (0, 0)),          # packed biases
        ],
        out_specs=pl.BlockSpec((bb * P, C), lambda i: (i, 0)),
        compiler_params=pltpu.CompilerParams(dimension_semantics=("parallel",)),
    )(diff, fts_flat, mask_flat, blk["w"], blk["b"])


def edgeconv_head_block(diff, fts_flat, mask_flat, poolw, blk, hp, *, bb, P, K, Din, C):
    B = diff.shape[0]
    nblk = B // bb
    NC = hp["w2"].shape[1]
    Cf = hp["wf"].shape[1]
    offs, _ = _slab_offsets(Din, C)
    out = pl.pallas_call(
        make_edgeconv_head_kernel(K, Din, C, offs, bb, P, Cf, NC),
        out_shape=jax.ShapeDtypeStruct((nblk, bb, NC), jnp.float32),
        grid=(nblk,),
        in_specs=[
            pl.BlockSpec((bb, K, P, Din), lambda i: (i, 0, 0, 0)),   # edge diffs (bf16)
            pl.BlockSpec((bb * P, Din), lambda i: (i, 0)),           # block-0 output
            pl.BlockSpec((bb * P, 1), lambda i: (i, 0)),             # mask
            pl.BlockSpec((bb * P, 1), lambda i: (i, 0)),             # mask / count
            pl.BlockSpec(blk["w"].shape, lambda i: (0, 0)),
            pl.BlockSpec(blk["b"].shape, lambda i: (0, 0)),
            pl.BlockSpec(hp["wf"].shape, lambda i: (0, 0)),
            pl.BlockSpec(hp["bf"].shape, lambda i: (0, 0)),
            pl.BlockSpec(hp["w1"].shape, lambda i: (0, 0)),
            pl.BlockSpec(hp["b1"].shape, lambda i: (0, 0)),
            pl.BlockSpec(hp["w2"].shape, lambda i: (0, 0)),
            pl.BlockSpec(hp["b2"].shape, lambda i: (0, 0)),
        ],
        out_specs=pl.BlockSpec((1, bb, NC), lambda i: (i, 0, 0)),
        compiler_params=pltpu.CompilerParams(dimension_semantics=("parallel",)),
    )(diff, fts_flat, mask_flat, poolw, blk["w"], blk["b"],
      hp["wf"], hp["bf"], hp["w1"], hp["b1"], hp["w2"], hp["b2"])
    return out.reshape(B, NC)


# ------------------------------ XLA index glue --------------------------------
def build_edge_diffs(pts, fts, k):
    """kNN ranking (default precision), neighbor gather and edge differences.
    Kept in XLA: distance + top_k + gather are pure index glue."""
    # TODO(synk): pass neighbor indices via PrefetchScalarGridSpec and gather /
    # subtract in-kernel so the (B, K, P, D) diff tensor never hits HBM.
    sq = jnp.sum(pts * pts, axis=-1, keepdims=True)                    # (B,P,1)
    dots = jnp.einsum("bpd,bqd->bpq", pts, pts)                        # (B,P,P)
    neg_d2 = 2.0 * dots - sq - jnp.swapaxes(sq, 1, 2)                  # -||xi-xj||^2
    _, idx = lax.top_k(neg_d2, k + 1)
    idx = idx[:, :, 1:]                                                # drop self
    idx_t = jnp.swapaxes(idx, 1, 2)                                    # (B,K,P)
    nbr = jax.vmap(lambda f, i: f[i])(fts, idx_t)                      # (B,K,P,D)
    diff = nbr - fts[:, None, :, :]                                    # nbr - center
    return diff.astype(jnp.bfloat16)


# ------------------------------ forward pass ----------------------------------
def particlenet_forward(points, features, params, *, batch_block=None):
    """points: (B, P, COORD_DIMS), features: (B, P, INPUT_DIMS), channels last."""
    B, P, _ = features.shape
    assert len(CONV_PARAMS) == 2, "fused block-1 + head assumes 2 EdgeConv blocks"
    if batch_block is None:
        bb = B // 2 if (B >= 2 and B % 2 == 0) else B    # >=2 parallel steps (v7x)
    else:
        bb = batch_block
    assert B % bb == 0

    mask = (jnp.sum(jnp.abs(features), axis=-1, keepdims=True) != 0)
    mask = mask.astype(jnp.float32)                                    # (B,P,1)
    points = points * mask
    features = features * mask
    coord_shift = (1.0 - mask) * 1e9
    counts = jnp.maximum(jnp.sum(mask, axis=1), 1.0)                   # (B,1)
    mask_flat = mask.reshape(B * P, 1)
    poolw = (mask / counts[:, None, :]).reshape(B * P, 1)              # mask / count

    # use_fts_bn: inference BatchNorm1d folded to per-channel affine.
    fts = (features * params["bn_fts_scale"] + params["bn_fts_bias"]) * mask

    # ----- EdgeConv block 0 -----
    K0, ch0 = CONV_PARAMS[0]
    C0 = ch0[-1]
    diff0 = build_edge_diffs(points + coord_shift, fts, K0)            # (B,K0,P,4)
    out0_flat = edgeconv_block(diff0, fts.reshape(B * P, INPUT_DIMS), mask_flat,
                               params["edge_blocks"][0],
                               bb=bb, P=P, K=K0, Din=INPUT_DIMS, C=C0)

    # ----- EdgeConv block 1 + fusion conv + pooling + FC head (fused) -----
    K1, ch1 = CONV_PARAMS[1]
    C1 = ch1[-1]
    out0 = out0_flat.reshape(B, P, C0)
    diff1 = build_edge_diffs(out0 + coord_shift, out0, K1)             # (B,K1,P,32)
    return edgeconv_head_block(diff1, out0_flat, mask_flat, poolw,
                               params["edge_blocks"][1], params["head"],
                               bb=bb, P=P, K=K1, Din=C0, C=C1)


# ------------------------------ parameter init --------------------------------
def init_params(key):
    keys = iter(jax.random.split(key, 64))

    def nrm(shape, scale):
        return (scale * jax.random.normal(next(keys), shape)).astype(jnp.float32)

    def bn(c):
        scale = (1.0 + 0.1 * jax.random.normal(next(keys), (1, c))).astype(jnp.float32)
        bias = (0.05 * jax.random.normal(next(keys), (1, c))).astype(jnp.float32)
        return scale, bias

    params = {}
    s, b = bn(INPUT_DIMS)
    params["bn_fts_scale"], params["bn_fts_bias"] = s, b

    blocks = []
    in_feat = INPUT_DIMS
    for _, channels in CONV_PARAMS:
        blk = {}
        c_prev = 2 * in_feat
        for li, c in enumerate(channels):
            blk[f"w{li}"] = nrm((c_prev, c), (1.0 / c_prev) ** 0.5)
            blk[f"s{li}"], blk[f"b{li}"] = bn(c)
            c_prev = c
        blk["wsc"] = nrm((in_feat, channels[-1]), (1.0 / in_feat) ** 0.5)
        blk["ssc"], blk["bsc"] = bn(channels[-1])
        blocks.append(blk)
        in_feat = channels[-1]
    params["edge_blocks"] = blocks

    in_chn = sum(c[-1] for _, c in CONV_PARAMS)                 # 96
    out_chn = int(min(max((in_chn // 128) * 128, 128), 1024))   # 128
    fusion = {"w": nrm((in_chn, out_chn), (1.0 / in_chn) ** 0.5)}
    fusion["s"], fusion["b"] = bn(out_chn)
    params["fusion"] = fusion

    params["fc"] = {
        "w1": nrm((out_chn, FC_HIDDEN), (1.0 / out_chn) ** 0.5),
        "b1": 0.01 * jnp.ones((1, FC_HIDDEN), jnp.float32),
        "w2": nrm((FC_HIDDEN, NUM_CLASSES), (1.0 / FC_HIDDEN) ** 0.5),
        "b2": jnp.zeros((1, NUM_CLASSES), jnp.float32),
    }
    return params


def prepare_params(raw):
    """Fold inference BN scales into weights, column-pack [w0_center | w_sc],
    pack each edge block into one bf16 weight slab + one f32 bias slab."""
    prep = {"bn_fts_scale": raw["bn_fts_scale"], "bn_fts_bias": raw["bn_fts_bias"]}
    blocks = []
    in_feat = INPUT_DIMS
    for bi, (_, channels) in enumerate(CONV_PARAMS):
        rb = raw["edge_blocks"][bi]
        C = channels[-1]
        assert all(ch == C for ch in channels), "row-packing assumes uniform widths"
        din = in_feat
        offs, total = _slab_offsets(din, C)
        w0 = rb["w0"] * rb["s0"]                            # (2*din, C), BN folded
        slab = jnp.zeros((total, 2 * C), jnp.float32)
        slab = slab.at[offs[0]:offs[0] + din, 0:C].set(w0[:din])           # center
        slab = slab.at[offs[0]:offs[0] + din, C:2 * C].set(rb["wsc"] * rb["ssc"])
        slab = slab.at[offs[1]:offs[1] + din, 0:C].set(w0[din:])           # neighbor
        slab = slab.at[offs[2]:offs[2] + C, 0:C].set(rb["w1"] * rb["s1"])
        slab = slab.at[offs[3]:offs[3] + C, 0:C].set(rb["w2"] * rb["s2"])
        bias = jnp.zeros((3, 2 * C), jnp.float32)
        bias = bias.at[0:1, 0:C].set(rb["b0"])
        bias = bias.at[0:1, C:2 * C].set(rb["bsc"])
        bias = bias.at[1:2, 0:C].set(rb["b1"])
        bias = bias.at[2:3, 0:C].set(rb["b2"])
        blocks.append({"w": slab.astype(jnp.bfloat16), "b": bias})
        in_feat = C
    prep["edge_blocks"] = blocks

    fu, fc = raw["fusion"], raw["fc"]
    prep["head"] = {
        "wf": (fu["w"] * fu["s"]).astype(jnp.bfloat16), "bf": fu["b"],
        "w1": fc["w1"].astype(jnp.bfloat16), "b1": fc["b1"],
        "w2": fc["w2"].astype(jnp.bfloat16), "b2": fc["b2"],
    }
    return prep


# ------------------------------ pure-JAX reference ----------------------------
def particlenet_reference(points, features, params):
    """Plain-jnp reference mirroring the kernels' folded-BN / bf16-weight math."""
    B, P, _ = features.shape
    mask = (jnp.sum(jnp.abs(features), axis=-1, keepdims=True) != 0).astype(jnp.float32)
    points = points * mask
    features = features * mask
    coord_shift = (1.0 - mask) * 1e9
    counts = jnp.maximum(jnp.sum(mask, axis=1), 1.0)
    mask_flat = mask.reshape(B * P, 1)
    fts = (features * params["bn_fts_scale"] + params["bn_fts_bias"]) * mask

    def mm(x, w):
        return jnp.dot(x.astype(jnp.bfloat16), w.astype(jnp.bfloat16),
                       preferred_element_type=jnp.float32)

    outputs = []
    in_feat = INPUT_DIMS
    for idx, (k, channels) in enumerate(CONV_PARAMS):
        C = channels[-1]
        din = in_feat
        pts = (points if idx == 0 else fts) + coord_shift
        diff = build_edge_diffs(pts, fts, k)                      # (B,k,P,din) bf16
        offs, _ = _slab_offsets(din, C)
        w = params["edge_blocks"][idx]["w"].astype(jnp.float32)
        b = params["edge_blocks"][idx]["b"]
        f2 = fts.reshape(B * P, din)
        c0 = mm(f2, w[offs[0]:offs[0] + din, 0:C]) + b[0:1, 0:C]
        sc = mm(f2, w[offs[0]:offs[0] + din, C:2 * C]) + b[0:1, C:2 * C]
        e = mm(diff.reshape(B * k * P, din), w[offs[1]:offs[1] + din, 0:C])
        h = jnp.maximum(e.reshape(B, k, P, C) + c0.reshape(B, 1, P, C), 0.0)
        h = jnp.maximum(mm(h.reshape(B * k * P, C), w[offs[2]:offs[2] + C, 0:C])
                        + b[1:2, 0:C], 0.0)
        h = jnp.maximum(mm(h, w[offs[3]:offs[3] + C, 0:C]) + b[2:3, 0:C], 0.0)
        m = (jnp.sum(h.reshape(B, k, P, C), axis=1) * (1.0 / k)).reshape(B * P, C)
        out = jnp.maximum(sc + m, 0.0) * mask_flat
        outputs.append(out)
        fts = out.reshape(B, P, C)
        in_feat = C

    hp = params["head"]
    concat = jnp.concatenate(outputs, axis=-1)                    # (B*P, 96)
    y = jnp.maximum(mm(concat, hp["wf"].astype(jnp.float32)) + hp["bf"], 0.0)
    y = y * mask_flat
    pooled = jnp.sum(y.reshape(B, P, -1), axis=1) / counts
    h = jnp.maximum(mm(pooled, hp["w1"].astype(jnp.float32)) + hp["b1"], 0.0)
    return mm(h, hp["w2"].astype(jnp.float32)) + hp["b2"]


# ---------------------------------- main ---------------------------------------
if __name__ == "__main__":
    key = jax.random.PRNGKey(0)
    kp, kf, kparam = jax.random.split(key, 3)

    B, P = 2, 16
    points = jax.random.normal(kp, (B, P, COORD_DIMS), dtype=jnp.float32)
    features = jax.random.normal(kf, (B, P, INPUT_DIMS), dtype=jnp.float32)

    # Zero (pad) the last 2 points of batch 0 to exercise the mask / coord-shift path.
    valid = (jnp.arange(P) < P - 2).astype(jnp.float32)[None, :, None]
    valid = jnp.concatenate([valid, jnp.ones_like(valid)], axis=0)
    points = points * valid
    features = features * valid

    params = prepare_params(init_params(kparam))

    fwd = jax.jit(particlenet_forward)
    out = jax.block_until_ready(fwd(points, features, params))

    assert out.shape == (B, NUM_CLASSES), out.shape
    assert bool(jnp.all(jnp.isfinite(out)))

    ref = jax.block_until_ready(jax.jit(particlenet_reference)(points, features, params))
    err = float(jnp.max(jnp.abs(out - ref)))
    scale = max(1.0, float(jnp.max(jnp.abs(ref))))
    assert err <= 5e-2 * scale, (err, scale)

    print("KERNEL_OK")
</pallas_src>

<mosaic_0001>
module attributes {stable_mosaic.version = 11 : i64} {
  func.func @kernel(%arg0: i32, %arg1: memref<1x7x16x4xbf16, #tpu.memory_space<vmem>>, %arg2: memref<16x4xf32, #tpu.memory_space<vmem>>, %arg3: memref<16x1xf32, #tpu.memory_space<vmem>>, %arg4: memref<96x64xbf16, #tpu.memory_space<vmem>>, %arg5: memref<3x64xf32, #tpu.memory_space<vmem>>, %arg6: memref<16x32xf32, #tpu.memory_space<vmem>>) attributes {dimension_semantics = [#tpu.dimension_semantics<parallel>], iteration_bounds = array<i64: 2>, scalar_prefetch = 0 : i64, scratch_operands = 0 : i64, tpu.core_type = #tpu.core_type<tc>, window_params = [{transform_indices = @transform_0, window_bounds = array<i64: 1, 7, 16, 4>}, {transform_indices = @transform_1, window_bounds = array<i64: 16, 4>}, {transform_indices = @transform_2, window_bounds = array<i64: 16, 1>}, {pipeline_mode = #tpu.pipeline_mode<synchronous>, transform_indices = @transform_3, window_bounds = array<i64: 96, 64>}, {pipeline_mode = #tpu.pipeline_mode<synchronous>, transform_indices = @transform_4, window_bounds = array<i64: 3, 64>}, {transform_indices = @transform_5, window_bounds = array<i64: 16, 32>}]} {
    %c0 = arith.constant 0 : index
    %c0_0 = arith.constant 0 : index
    %0 = vector.load %arg2[%c0, %c0_0] : memref<16x4xf32, #tpu.memory_space<vmem>>, vector<16x4xf32>
    %1 = arith.truncf %0 : vector<16x4xf32> to vector<16x4xbf16>
    %c0_1 = arith.constant 0 : index
    %c0_2 = arith.constant 0 : index
    %2 = vector.load %arg3[%c0_1, %c0_2] : memref<16x1xf32, #tpu.memory_space<vmem>>, vector<16x1xf32>
    %c0_3 = arith.constant 0 : index
    %c0_4 = arith.constant 0 : index
    %3 = vector.load %arg4[%c0_3, %c0_4] : memref<96x64xbf16, #tpu.memory_space<vmem>>, vector<4x64xbf16>
    %cst = arith.constant dense<0.000000e+00> : vector<16x64xf32>
    %4 = tpu.matmul %1, %3, %cst {dimension_numbers = #tpu.dot_dimension_numbers<[1], [0], [0], [1], [0, 0, 1, 1], [], []>} : vector<16x4xbf16>, vector<4x64xbf16>, vector<16x64xf32> -> vector<16x64xf32>
    %c0_5 = arith.constant 0 : index
    %c0_6 = arith.constant 0 : index
    %5 = vector.load %arg5[%c0_5, %c0_6] : memref<3x64xf32, #tpu.memory_space<vmem>>, vector<1x64xf32>
    %6 = vector.broadcast %5 : vector<1x64xf32> to vector<16x64xf32>
    %7 = arith.addf %4, %6 : vector<16x64xf32>
    %8 = vector.extract_strided_slice %7 {offsets = [0, 0], sizes = [16, 32], strides = [1, 1]} : vector<16x64xf32> to vector<16x32xf32>
    %9 = vector.extract_strided_slice %7 {offsets = [0, 32], sizes = [16, 32], strides = [1, 1]} : vector<16x64xf32> to vector<16x32xf32>
    %c0_7 = arith.constant 0 : index
    %c0_8 = arith.constant 0 : index
    %c0_9 = arith.constant 0 : index
    %c0_10 = arith.constant 0 : index
    %10 = vector.load %arg1[%c0_7, %c0_8, %c0_9, %c0_10] : memref<1x7x16x4xbf16, #tpu.memory_space<vmem>>, vector<1x7x16x4xbf16>
    %11 = vector.shape_cast %10 : vector<1x7x16x4xbf16> to vector<112x4xbf16>
    %c16 = arith.constant 16 : index
    %c0_11 = arith.constant 0 : index
    %12 = vector.load %arg4[%c16, %c0_11] : memref<96x64xbf16, #tpu.memory_space<vmem>>, vector<4x32xbf16>
    %cst_12 = arith.constant dense<0.000000e+00> : vector<112x32xf32>
    %13 = tpu.matmul %11, %12, %cst_12 {dimension_numbers = #tpu.dot_dimension_numbers<[1], [0], [0], [1], [0, 0, 1, 1], [], []>} : vector<112x4xbf16>, vector<4x32xbf16>, vector<112x32xf32> -> vector<112x32xf32>
    %14 = vector.shape_cast %13 : vector<112x32xf32> to vector<1x7x16x32xf32>
    %15 = vector.shape_cast %8 : vector<16x32xf32> to vector<1x1x16x32xf32>
    %16 = vector.broadcast %15 : vector<1x1x16x32xf32> to vector<1x7x16x32xf32>
    %17 = arith.addf %14, %16 : vector<1x7x16x32xf32>
    %cst_13 = arith.constant 0.000000e+00 : f32
    %18 = vector.broadcast %cst_13 : f32 to vector<1x7x16x32xf32>
    %19 = arith.maximumf %17, %18 : vector<1x7x16x32xf32>
    %20 = vector.shape_cast %19 : vector<1x7x16x32xf32> to vector<112x32xf32>
    %21 = arith.truncf %20 : vector<112x32xf32> to vector<112x32xbf16>
    %c32 = arith.constant 32 : index
    %c0_14 = arith.constant 0 : index
    %22 = vector.load %arg4[%c32, %c0_14] : memref<96x64xbf16, #tpu.memory_space<vmem>>, vector<32x32xbf16>
    %cst_15 = arith.constant dense<0.000000e+00> : vector<112x32xf32>
    %23 = tpu.matmul %21, %22, %cst_15 {dimension_numbers = #tpu.dot_dimension_numbers<[1], [0], [0], [1], [0, 0, 1, 1], [], []>} : vector<112x32xbf16>, vector<32x32xbf16>, vector<112x32xf32> -> vector<112x32xf32>
    %c1 = arith.constant 1 : index
    %c0_16 = arith.constant 0 : index
    %24 = vector.load %arg5[%c1, %c0_16] : memref<3x64xf32, #tpu.memory_space<vmem>>, vector<1x32xf32>
    %25 = vector.broadcast %24 : vector<1x32xf32> to vector<112x32xf32>
    %26 = arith.addf %23, %25 : vector<112x32xf32>
    %cst_17 = arith.constant 0.000000e+00 : f32
    %27 = vector.broadcast %cst_17 : f32 to vector<112x32xf32>
    %28 = arith.maximumf %26, %27 : vector<112x32xf32>
    %29 = arith.truncf %28 : vector<112x32xf32> to vector<112x32xbf16>
    %c64 = arith.constant 64 : index
    %c0_18 = arith.constant 0 : index
    %30 = vector.load %arg4[%c64, %c0_18] : memref<96x64xbf16, #tpu.memory_space<vmem>>, vector<32x32xbf16>
    %cst_19 = arith.constant dense<0.000000e+00> : vector<112x32xf32>
    %31 = tpu.matmul %29, %30, %cst_19 {dimension_numbers = #tpu.dot_dimension_numbers<[1], [0], [0], [1], [0, 0, 1, 1], [], []>} : vector<112x32xbf16>, vector<32x32xbf16>, vector<112x32xf32> -> vector<112x32xf32>
    %c2 = arith.constant 2 : index
    %c0_20 = arith.constant 0 : index
    %32 = vector.load %arg5[%c2, %c0_20] : memref<3x64xf32, #tpu.memory_space<vmem>>, vector<1x32xf32>
    %33 = vector.broadcast %32 : vector<1x32xf32> to vector<112x32xf32>
    %34 = arith.addf %31, %33 : vector<112x32xf32>
    %cst_21 = arith.constant 0.000000e+00 : f32
    %35 = vector.broadcast %cst_21 : f32 to vector<112x32xf32>
    %36 = arith.maximumf %34, %35 : vector<112x32xf32>
    %37 = vector.shape_cast %36 : vector<112x32xf32> to vector<1x7x16x32xf32>
    %cst_22 = arith.constant dense<0.000000e+00> : vector<1x16x32xf32>
    %38 = vector.multi_reduction <add>, %37, %cst_22 [1] : vector<1x7x16x32xf32> to vector<1x16x32xf32>
    %cst_23 = arith.constant 0.142857149 : f32
    %39 = vector.broadcast %cst_23 : f32 to vector<1x16x32xf32>
    %40 = arith.mulf %38, %39 : vector<1x16x32xf32>
    %41 = vector.shape_cast %40 : vector<1x16x32xf32> to vector<16x32xf32>
    %42 = arith.addf %9, %41 : vector<16x32xf32>
    %cst_24 = arith.constant 0.000000e+00 : f32
    %43 = vector.broadcast %cst_24 : f32 to vector<16x32xf32>
    %44 = arith.maximumf %42, %43 : vector<16x32xf32>
    %45 = vector.broadcast %2 : vector<16x1xf32> to vector<16x32xf32>
    %46 = arith.mulf %44, %45 : vector<16x32xf32>
    %c0_25 = arith.constant 0 : index
    %c0_26 = arith.constant 0 : index
    %47 = vector.load %arg6[%c0_25, %c0_26] : memref<16x32xf32, #tpu.memory_space<vmem>>, vector<16x32xf32>
    tpu.vector_store %arg6[%c0_25, %c0_26], %46 {strides = array<i32>} : memref<16x32xf32, #tpu.memory_space<vmem>>, vector<16x32xf32>,
    return
  }
  func.func @transform_0(%arg0: i32) -> (i32, i32, i32, i32) {
    %c0_i32 = arith.constant 0 : i32
    %c0_i32_0 = arith.constant 0 : i32
    %c0_i32_1 = arith.constant 0 : i32
    %c0_i32_2 = arith.constant 0 : i32
    return %arg0, %c0_i32, %c0_i32_0, %c0_i32_1 : i32, i32, i32, i32
  }
  func.func @transform_1(%arg0: i32) -> (i32, i32) {
    %c0_i32 = arith.constant 0 : i32
    %c0_i32_0 = arith.constant 0 : i32
    return %arg0, %c0_i32 : i32, i32
  }
  func.func @transform_2(%arg0: i32) -> (i32, i32) {
    %c0_i32 = arith.constant 0 : i32
    %c0_i32_0 = arith.constant 0 : i32
    return %arg0, %c0_i32 : i32, i32
  }
  func.func @transform_3(%arg0: i32) -> (i32, i32) {
    %c0_i32 = arith.constant 0 : i32
    %c0_i32_0 = arith.constant 0 : i32
    %c0_i32_1 = arith.constant 0 : i32
    return %c0_i32, %c0_i32_0 : i32, i32
  }
  func.func @transform_4(%arg0: i32) -> (i32, i32) {
    %c0_i32 = arith.constant 0 : i32
    %c0_i32_0 = arith.constant 0 : i32
    %c0_i32_1 = arith.constant 0 : i32
    return %c0_i32, %c0_i32_0 : i32, i32
  }
  func.func @transform_5(%arg0: i32) -> (i32, i32) {
    %c0_i32 = arith.constant 0 : i32
    %c0_i32_0 = arith.constant 0 : i32
    return %arg0, %c0_i32 : i32, i32
  }
}

module attributes {stable_mosaic.version = 11 : i64} {
  func.func @kernel(%arg0: i32, %arg1: memref<1x7x16x32xbf16, #tpu.memory_space<vmem>>, %arg2: memref<16x32xf32, #tpu.memory_space<vmem>>, %arg3: memref<16x1xf32, #tpu.memory_space<vmem>>, %arg4: memref<16x1xf32, #tpu.memory_space<vmem>>, %arg5: memref<192x128xbf16, #tpu.memory_space<vmem>>, %arg6: memref<3x128xf32, #tpu.memory_space<vmem>>, %arg7: memref<96x128xbf16, #tpu.memory_space<vmem>>, %arg8: memref<1x128xf32, #tpu.memory_space<vmem>>, %arg9: memref<128x128xbf16, #tpu.memory_space<vmem>>, %arg10: memref<1x128xf32, #tpu.memory_space<vmem>>, %arg11: memref<128x5xbf16, #tpu.memory_space<vmem>>, %arg12: memref<1x5xf32, #tpu.memory_space<vmem>>, %arg13: memref<1x1x5xf32, #tpu.memory_space<vmem>>) attributes {dimension_semantics = [#tpu.dimension_semantics<parallel>], iteration_bounds = array<i64: 2>, scalar_prefetch = 0 : i64, scratch_operands = 0 : i64, tpu.core_type = #tpu.core_type<tc>, window_params = [{transform_indices = @transform_0, window_bounds = array<i64: 1, 7, 16, 32>}, {transform_indices = @transform_1, window_bounds = array<i64: 16, 32>}, {transform_indices = @transform_2, window_bounds = array<i64: 16, 1>}, {transform_indices = @transform_3, window_bounds = array<i64: 16, 1>}, {pipeline_mode = #tpu.pipeline_mode<synchronous>, transform_indices = @transform_4, window_bounds = array<i64: 192, 128>}, {pipeline_mode = #tpu.pipeline_mode<synchronous>, transform_indices = @transform_5, window_bounds = array<i64: 3, 128>}, {pipeline_mode = #tpu.pipeline_mode<synchronous>, transform_indices = @transform_6, window_bounds = array<i64: 96, 128>}, {pipeline_mode = #tpu.pipeline_mode<synchronous>, transform_indices = @transform_7, window_bounds = array<i64: 1, 128>}, {pipeline_mode = #tpu.pipeline_mode<synchronous>, transform_indices = @transform_8, window_bounds = array<i64: 128, 128>}, {pipeline_mode = #tpu.pipeline_mode<synchronous>, transform_indices = @transform_9, window_bounds = array<i64: 1, 128>}, {pipeline_mode = #tpu.pipeline_mode<synchronous>, transform_indices = @transform_10, window_bounds = array<i64: 128, 5>}, {pipeline_mode = #tpu.pipeline_mode<synchronous>, transform_indices = @transform_11, window_bounds = array<i64: 1, 5>}, {transform_indices = @transform_12, window_bounds = array<i64: 1, 1, 5>}]} {
    %c0 = arith.constant 0 : index
    %c0_0 = arith.constant 0 : index
    %0 = vector.load %arg2[%c0, %c0_0] : memref<16x32xf32, #tpu.memory_space<vmem>>, vector<16x32xf32>
    %1 = arith.truncf %0 : vector<16x32xf32> to vector<16x32xbf16>
    %c0_1 = arith.constant 0 : index
    %c0_2 = arith.constant 0 : index
    %2 = vector.load %arg3[%c0_1, %c0_2] : memref<16x1xf32, #tpu.memory_space<vmem>>, vector<16x1xf32>
    %c0_3 = arith.constant 0 : index
    %c0_4 = arith.constant 0 : index
    %3 = vector.load %arg5[%c0_3, %c0_4] : memref<192x128xbf16, #tpu.memory_space<vmem>>, vector<32x128xbf16>
    %cst = arith.constant dense<0.000000e+00> : vector<16x128xf32>
    %4 = tpu.matmul %1, %3, %cst {dimension_numbers = #tpu.dot_dimension_numbers<[1], [0], [0], [1], [0, 0, 1, 1], [], []>} : vector<16x32xbf16>, vector<32x128xbf16>, vector<16x128xf32> -> vector<16x128xf32>
    %c0_5 = arith.constant 0 : index
    %c0_6 = arith.constant 0 : index
    %5 = vector.load %arg6[%c0_5, %c0_6] : memref<3x128xf32, #tpu.memory_space<vmem>>, vector<1x128xf32>
    %6 = vector.broadcast %5 : vector<1x128xf32> to vector<16x128xf32>
    %7 = arith.addf %4, %6 : vector<16x128xf32>
    %8 = vector.extract_strided_slice %7 {offsets = [0, 0], sizes = [16, 64], strides = [1, 1]} : vector<16x128xf32> to vector<16x64xf32>
    %9 = vector.extract_strided_slice %7 {offsets = [0, 64], sizes = [16, 64], strides = [1, 1]} : vector<16x128xf32> to vector<16x64xf32>
    %c0_7 = arith.constant 0 : index
    %c0_8 = arith.constant 0 : index
    %c0_9 = arith.constant 0 : index
    %c0_10 = arith.constant 0 : index
    %10 = vector.load %arg1[%c0_7, %c0_8, %c0_9, %c0_10] : memref<1x7x16x32xbf16, #tpu.memory_space<vmem>>, vector<1x7x16x32xbf16>
    %11 = vector.shape_cast %10 : vector<1x7x16x32xbf16> to vector<112x32xbf16>
    %c32 = arith.constant 32 : index
    %c0_11 = arith.constant 0 : index
    %12 = vector.load %arg5[%c32, %c0_11] : memref<192x128xbf16, #tpu.memory_space<vmem>>, vector<32x64xbf16>
    %cst_12 = arith.constant dense<0.000000e+00> : vector<112x64xf32>
    %13 = tpu.matmul %11, %12, %cst_12 {dimension_numbers = #tpu.dot_dimension_numbers<[1], [0], [0], [1], [0, 0, 1, 1], [], []>} : vector<112x32xbf16>, vector<32x64xbf16>, vector<112x64xf32> -> vector<112x64xf32>
    %14 = vector.shape_cast %13 : vector<112x64xf32> to vector<1x7x16x64xf32>
    %15 = vector.shape_cast %8 : vector<16x64xf32> to vector<1x1x16x64xf32>
    %16 = vector.broadcast %15 : vector<1x1x16x64xf32> to vector<1x7x16x64xf32>
    %17 = arith.addf %14, %16 : vector<1x7x16x64xf32>
    %cst_13 = arith.constant 0.000000e+00 : f32
    %18 = vector.broadcast %cst_13 : f32 to vector<1x7x16x64xf32>
    %19 = arith.maximumf %17, %18 : vector<1x7x16x64xf32>
    %20 = vector.shape_cast %19 : vector<1x7x16x64xf32> to vector<112x64xf32>
    %21 = arith.truncf %20 : vector<112x64xf32> to vector<112x64xbf16>
    %c64 = arith.constant 64 : index
    %c0_14 = arith.constant 0 : index
    %22 = vector.load %arg5[%c64, %c0_14] : memref<192x128xbf16, #tpu.memory_space<vmem>>, vector<64x64xbf16>
    %cst_15 = arith.constant dense<0.000000e+00> : vector<112x64xf32>
    %23 = tpu.matmul %21, %22, %cst_15 {dimension_numbers = #tpu.dot_dimension_numbers<[1], [0], [0], [1], [0, 0, 1, 1], [], []>} : vector<112x64xbf16>, vector<64x64xbf16>, vector<112x64xf32> -> vector<112x64xf32>
    %c1 = arith.constant 1 : index
    %c0_16 = arith.constant 0 : index
    %24 = vector.load %arg6[%c1, %c0_16] : memref<3x128xf32, #tpu.memory_space<vmem>>, vector<1x64xf32>
    %25 = vector.broadcast %24 : vector<1x64xf32> to vector<112x64xf32>
    %26 = arith.addf %23, %25 : vector<112x64xf32>
    %cst_17 = arith.constant 0.000000e+00 : f32
    %27 = vector.broadcast %cst_17 : f32 to vector<112x64xf32>
    %28 = arith.maximumf %26, %27 : vector<112x64xf32>
    %29 = arith.truncf %28 : vector<112x64xf32> to vector<112x64xbf16>
    %c128 = arith.constant 128 : index
    %c0_18 = arith.constant 0 : index
    %30 = vector.load %arg5[%c128, %c0_18] : memref<192x128xbf16, #tpu.memory_space<vmem>>, vector<64x64xbf16>
    %cst_19 = arith.constant dense<0.000000e+00> : vector<112x64xf32>
    %31 = tpu.matmul %29, %30, %cst_19 {dimension_numbers = #tpu.dot_dimension_numbers<[1], [0], [0], [1], [0, 0, 1, 1], [], []>} : vector<112x64xbf16>, vector<64x64xbf16>, vector<112x64xf32> -> vector<112x64xf32>
    %c2 = arith.constant 2 : index
    %c0_20 = arith.constant 0 : index
    %32 = vector.load %arg6[%c2, %c0_20] : memref<3x128xf32, #tpu.memory_space<vmem>>, vector<1x64xf32>
    %33 = vector.broadcast %32 : vector<1x64xf32> to vector<112x64xf32>
    %34 = arith.addf %31, %33 : vector<112x64xf32>
    %cst_21 = arith.constant 0.000000e+00 : f32
    %35 = vector.broadcast %cst_21 : f32 to vector<112x64xf32>
    %36 = arith.maximumf %34, %35 : vector<112x64xf32>
    %37 = vector.shape_cast %36 : vector<112x64xf32> to vector<1x7x16x64xf32>
    %cst_22 = arith.constant dense<0.000000e+00> : vector<1x16x64xf32>
    %38 = vector.multi_reduction <add>, %37, %cst_22 [1] : vector<1x7x16x64xf32> to vector<1x16x64xf32>
    %cst_23 = arith.constant 0.142857149 : f32
    %39 = vector.broadcast %cst_23 : f32 to vector<1x16x64xf32>
    %40 = arith.mulf %38, %39 : vector<1x16x64xf32>
    %41 = vector.shape_cast %40 : vector<1x16x64xf32> to vector<16x64xf32>
    %42 = arith.addf %9, %41 : vector<16x64xf32>
    %cst_24 = arith.constant 0.000000e+00 : f32
    %43 = vector.broadcast %cst_24 : f32 to vector<16x64xf32>
    %44 = arith.maximumf %42, %43 : vector<16x64xf32>
    %45 = vector.broadcast %2 : vector<16x1xf32> to vector<16x64xf32>
    %46 = arith.mulf %44, %45 : vector<16x64xf32>
    %c0_25 = arith.constant 0 : index
    %c0_26 = arith.constant 0 : index
    %47 = vector.load %arg7[%c0_25, %c0_26] : memref<96x128xbf16, #tpu.memory_space<vmem>>, vector<32x128xbf16>
    %cst_27 = arith.constant dense<0.000000e+00> : vector<16x128xf32>
    %48 = tpu.matmul %1, %47, %cst_27 {dimension_numbers = #tpu.dot_dimension_numbers<[1], [0], [0], [1], [0, 0, 1, 1], [], []>} : vector<16x32xbf16>, vector<32x128xbf16>, vector<16x128xf32> -> vector<16x128xf32>
    %49 = arith.truncf %46 : vector<16x64xf32> to vector<16x64xbf16>
    %c32_28 = arith.constant 32 : index
    %c0_29 = arith.constant 0 : index
    %50 = vector.load %arg7[%c32_28, %c0_29] : memref<96x128xbf16, #tpu.memory_space<vmem>>, vector<64x128xbf16>
    %cst_30 = arith.constant dense<0.000000e+00> : vector<16x128xf32>
    %51 = tpu.matmul %49, %50, %cst_30 {dimension_numbers = #tpu.dot_dimension_numbers<[1], [0], [0], [1], [0, 0, 1, 1], [], []>} : vector<16x64xbf16>, vector<64x128xbf16>, vector<16x128xf32> -> vector<16x128xf32>
    %52 = arith.addf %48, %51 : vector<16x128xf32>
    %c0_31 = arith.constant 0 : index
    %c0_32 = arith.constant 0 : index
    %53 = vector.load %arg8[%c0_31, %c0_32] : memref<1x128xf32, #tpu.memory_space<vmem>>, vector<1x128xf32>
    %54 = vector.broadcast %53 : vector<1x128xf32> to vector<16x128xf32>
    %55 = arith.addf %52, %54 : vector<16x128xf32>
    %cst_33 = arith.constant 0.000000e+00 : f32
    %56 = vector.broadcast %cst_33 : f32 to vector<16x128xf32>
    %57 = arith.maximumf %55, %56 : vector<16x128xf32>
    %c0_34 = arith.constant 0 : index
    %c0_35 = arith.constant 0 : index
    %58 = vector.load %arg4[%c0_34, %c0_35] : memref<16x1xf32, #tpu.memory_space<vmem>>, vector<16x1xf32>
    %59 = vector.broadcast %58 : vector<16x1xf32> to vector<16x128xf32>
    %60 = arith.mulf %57, %59 : vector<16x128xf32>
    %61 = vector.shape_cast %60 : vector<16x128xf32> to vector<1x16x128xf32>
    %cst_36 = arith.constant dense<0.000000e+00> : vector<1x128xf32>
    %62 = vector.multi_reduction <add>, %61, %cst_36 [1] : vector<1x16x128xf32> to vector<1x128xf32>
    %63 = arith.truncf %62 : vector<1x128xf32> to vector<1x128xbf16>
    %c0_37 = arith.constant 0 : index
    %c0_38 = arith.constant 0 : index
    %64 = vector.load %arg9[%c0_37, %c0_38] : memref<128x128xbf16, #tpu.memory_space<vmem>>, vector<128x128xbf16>
    %cst_39 = arith.constant dense<0.000000e+00> : vector<1x128xf32>
    %65 = tpu.matmul %63, %64, %cst_39 {dimension_numbers = #tpu.dot_dimension_numbers<[1], [0], [0], [1], [0, 0, 1, 1], [], []>} : vector<1x128xbf16>, vector<128x128xbf16>, vector<1x128xf32> -> vector<1x128xf32>
    %c0_40 = arith.constant 0 : index
    %c0_41 = arith.constant 0 : index
    %66 = vector.load %arg10[%c0_40, %c0_41] : memref<1x128xf32, #tpu.memory_space<vmem>>, vector<1x128xf32>
    %67 = arith.addf %65, %66 : vector<1x128xf32>
    %cst_42 = arith.constant 0.000000e+00 : f32
    %68 = vector.broadcast %cst_42 : f32 to vector<1x128xf32>
    %69 = arith.maximumf %67, %68 : vector<1x128xf32>
    %70 = arith.truncf %69 : vector<1x128xf32> to vector<1x128xbf16>
    %c0_43 = arith.constant 0 : index
    %c0_44 = arith.constant 0 : index
    %71 = vector.load %arg11[%c0_43, %c0_44] : memref<128x5xbf16, #tpu.memory_space<vmem>>, vector<128x5xbf16>
    %cst_45 = arith.constant dense<0.000000e+00> : vector<1x5xf32>
    %72 = tpu.matmul %70, %71, %cst_45 {dimension_numbers = #tpu.dot_dimension_numbers<[1], [0], [0], [1], [0, 0, 1, 1], [], []>} : vector<1x128xbf16>, vector<128x5xbf16>, vector<1x5xf32> -> vector<1x5xf32>
    %c0_46 = arith.constant 0 : index
    %c0_47 = arith.constant 0 : index
    %73 = vector.load %arg12[%c0_46, %c0_47] : memref<1x5xf32, #tpu.memory_space<vmem>>, vector<1x5xf32>
    %74 = arith.addf %72, %73 : vector<1x5xf32>
    %c0_48 = arith.constant 0 : index
    %c0_49 = arith.constant 0 : index
    %c0_50 = arith.constant 0 : index
    %75 = vector.load %arg13[%c0_48, %c0_49, %c0_50] : memref<1x1x5xf32, #tpu.memory_space<vmem>>, vector<1x1x5xf32>
    %76 = vector.shape_cast %75 : vector<1x1x5xf32> to vector<1x5xf32>
    %77 = vector.shape_cast %74 : vector<1x5xf32> to vector<1x1x5xf32>
    tpu.vector_store %arg13[%c0_48, %c0_49, %c0_50], %77 {strides = array<i32>} : memref<1x1x5xf32, #tpu.memory_space<vmem>>, vector<1x1x5xf32>,
    return
  }
  func.func @transform_0(%arg0: i32) -> (i32, i32, i32, i32) {
    %c0_i32 = arith.constant 0 : i32
    %c0_i32_0 = arith.constant 0 : i32
    %c0_i32_1 = arith.constant 0 : i32
    %c0_i32_2 = arith.constant 0 : i32
    return %arg0, %c0_i32, %c0_i32_0, %c0_i32_1 : i32, i32, i32, i32
  }
  func.func @transform_1(%arg0: i32) -> (i32, i32) {
    %c0_i32 = arith.constant 0 : i32
    %c0_i32_0 = arith.constant 0 : i32
    return %arg0, %c0_i32 : i32, i32
  }
  func.func @transform_2(%arg0: i32) -> (i32, i32) {
    %c0_i32 = arith.constant 0 : i32
    %c0_i32_0 = arith.constant 0 : i32
    return %arg0, %c0_i32 : i32, i32
  }
  func.func @transform_3(%arg0: i32) -> (i32, i32) {
    %c0_i32 = arith.constant 0 : i32
    %c0_i32_0 = arith.constant 0 : i32
    return %arg0, %c0_i32 : i32, i32
  }
  func.func @transform_4(%arg0: i32) -> (i32, i32) {
    %c0_i32 = arith.constant 0 : i32
    %c0_i32_0 = arith.constant 0 : i32
    %c0_i32_1 = arith.constant 0 : i32
    return %c0_i32, %c0_i32_0 : i32, i32
  }
  func.func @transform_5(%arg0: i32) -> (i32, i32) {
    %c0_i32 = arith.constant 0 : i32
    %c0_i32_0 = arith.constant 0 : i32
    %c0_i32_1 = arith.constant 0 : i32
    return %c0_i32, %c0_i32_0 : i32, i32
  }
  func.func @transform_6(%arg0: i32) -> (i32, i32) {
    %c0_i32 = arith.constant 0 : i32
    %c0_i32_0 = arith.constant 0 : i32
    %c0_i32_1 = arith.constant 0 : i32
    return %c0_i32, %c0_i32_0 : i32, i32
  }
  func.func @transform_7(%arg0: i32) -> (i32, i32) {
    %c0_i32 = arith.constant 0 : i32
    %c0_i32_0 = arith.constant 0 : i32
    %c0_i32_1 = arith.constant 0 : i32
    return %c0_i32, %c0_i32_0 : i32, i32
  }
  func.func @transform_8(%arg0: i32) -> (i32, i32) {
    %c0_i32 = arith.constant 0 : i32
    %c0_i32_0 = arith.constant 0 : i32
    %c0_i32_1 = arith.constant 0 : i32
    return %c0_i32, %c0_i32_0 : i32, i32
  }
  func.func @transform_9(%arg0: i32) -> (i32, i32) {
    %c0_i32 = arith.constant 0 : i32
    %c0_i32_0 = arith.constant 0 : i32
    %c0_i32_1 = arith.constant 0 : i32
    return %c0_i32, %c0_i32_0 : i32, i32
  }
  func.func @transform_10(%arg0: i32) -> (i32, i32) {
    %c0_i32 = arith.constant 0 : i32
    %c0_i32_0 = arith.constant 0 : i32
    %c0_i32_1 = arith.constant 0 : i32
    return %c0_i32, %c0_i32_0 : i32, i32
  }
  func.func @transform_11(%arg0: i32) -> (i32, i32) {
    %c0_i32 = arith.constant 0 : i32
    %c0_i32_0 = arith.constant 0 : i32
    %c0_i32_1 = arith.constant 0 : i32
    return %c0_i32, %c0_i32_0 : i32, i32
  }
  func.func @transform_12(%arg0: i32) -> (i32, i32, i32) {
    %c0_i32 = arith.constant 0 : i32
    %c0_i32_0 = arith.constant 0 : i32
    %c0_i32_1 = arith.constant 0 : i32
    return %arg0, %c0_i32, %c0_i32_0 : i32, i32, i32
  }
}

</mosaic_0001>

<llo_original>
// kernel: sub.41
$region0: #{sub.41}
  %s0 = inlined_call_operand.vmem [shape: f32[32], index: 0, kind: input, shape index: {}]
  %s1 = inlined_call_operand.vmem [shape: f32[2,16], index: 1, kind: output, shape index: {}]
  $region1: #{sub.41} parent=0
    #allocation0 [shape = 'u8[4096]{0}', space=vmem, size = 0x1000, scoped, tag = 'scoped mem for output reshape']
    #allocation1 [shape = 'u8[4096]{0}', space=vmem, size = 0x1000, scoped, tag = 'scoped mem for input reshape']
    %s3 = ssub.s32 2, 1
    %v4 = vld [vmem:[%s0] sm:%s3]
    %5 = vst [vmem:[#allocation1] sm:%s3] %v4
    %v6 = vld [vmem:[#allocation1] sm:$0x1]
    %vm7 = vcmask 130048
    %8 = vst.msk [vmem:[#allocation0] sm:$0x1] %vm7, %v6
    %v9 = vld [vmem:[#allocation1] sm:$0x1]
    %10 = vrot.lane.b32.xlu0 %v9, 112
    %v11 = vpop.permute.xlu0 %10
    %vm12 = vcmask 130048
    %s13 = scalar_lea.vmem [#allocation0], 1
    %14 = vst.msk [vmem:[%s13] sm:$0x1] %vm12, %v11
    %s16 = ssub.s32 4, 1
    %v17 = vld [vmem:[#allocation0] sm:%s16]
    %s19 = ssub.s32 4, 1
    %20 = vst [vmem:[%s1] sm:%s19] %v17

// kernel: div.0
$region0: #{div.0}
  #allocation0 [shape = 's32[1]{0}', space=sflag, size = 0x4, scoped, tag = 'scoped memory for div.0']
  %s0 = inlined_call_operand.vmem [shape: f32[32,1], index: 0, kind: input, shape index: {}]
  %s1 = inlined_call_operand.vmem [shape: f32[32,1], index: 1, kind: input, shape index: {}]
  %s2 = inlined_call_operand.vmem [shape: f32[32,1], index: 2, kind: output, shape index: {}]
  %v3 = vld [vmem:[%s0] sm:$0x1]
  %v4 = vld [vmem:[%s1] sm:$0x1]
  %5 = xla_tuple %v3, %v4
  %6 = xla_tuple %5
  %v7 = vrcp.pop %v4
  %v8 = vmul.f32 %v4, %v7
  %v9 = vsub.f32 1.0, %v8
  %v10 = vmul.f32 %v7, %v9
  %v11 = vadd.f32 %v7, %v10
  %vm12 = vweird.f32 %v4
  %vm13 = vweird.f32 %v7
  %vm14 = vmor %vm12, %vm13
  %v15 = vsel %vm14, %v7, %v11
  %v16 = vand.u32 2147483647, %v4
  %vm17 = vcmp.eq.f32.partialorder %v16, 8.507059e+37
  %v18 = vand.u32 %v4, 2147483648
  %v19 = vor.u32 1.1754944e-38, %v18
  %v20 = vsel %vm17, %v19, %v15
  %v21 = vmul.f32 %v3, %v20
  %22 = xla_tuple %v21
  %23 = vst [vmem:[%s2] sm:$0x1] %v21

// kernel: particlenet_forward.2
$region0: #{particlenet_forward.2}
  #allocation0 [shape = 'u32[]', space=smem, size = 0x4, offset = 0x4, fixed_abs, tag = 'smem constant byte address 0x4 - core index']
  #allocation1 [shape = 'u32[72,128]{1,0:T(1,128)}', space=vmem, size = 0x9000, scoped, tag = 'internal scratch']
  %s0 = inlined_call_operand.vmem [shape: bf16[2,7,16,4], index: 0, kind: input, shape index: {}]
  %s1 = inlined_call_operand.vmem [shape: f32[32,4], index: 1, kind: input, shape index: {}]
  %s2 = inlined_call_operand.vmem [shape: f32[32,1], index: 2, kind: input, shape index: {}]
  %s3 = inlined_call_operand.vmem [shape: bf16[96,64], index: 3, kind: input, shape index: {}]
  %s4 = inlined_call_operand.vmem [shape: f32[3,64], index: 4, kind: input, shape index: {}]
  %s5 = inlined_call_operand.vmem [shape: f32[32,32], index: 5, kind: output, shape index: {}]
  %s6 = sld [smem:[#allocation0]]
  $region53: #{particlenet_forward.2} parent=0
    _
  %s8 = ssub.s32 1, %s6
  %s9 = scalar_select 0, %s8, %s6
  loop: start=0, step=1, limit=4
  $region2: #{particlenet_forward.2} parent=0 // loop_pre_header
    _
  $region3: #{particlenet_forward.2} parent=0 // loop_header
    %s11 = sphi 0, %s15
    %p12 = scmp.ge.s32.totalorder %s11, 4
    %s21 = sphi 0, %s23
    %s24 = sphi 0, %s21
    %s25 = sphi 0, %s24
    %s41 = sphi 0, %s25
    %s47 = sphi 0, %s49
    %s50 = sphi 0, %s47
    %s51 = sphi 0, %s50
    %s67 = sphi 0, %s51
    %s73 = sphi 0, %s75
    %s76 = sphi 0, %s73
    %s77 = sphi 0, %s76
    %s93 = sphi 0, %s77
    %s97 = sphi 0, %s97
    %s99 = sphi 0, %s97
    %s100 = sphi 0, %s99
    %s114 = sphi 0, %s100
    %s118 = sphi 0, %s118
    %s120 = sphi 0, %s118
    %s121 = sphi 0, %s120
    %s135 = sphi 0, %s121
    %s141 = sphi 0, %s143
    %s144 = sphi 0, %s141
    %s145 = sphi 0, %s144
    %s161 = sphi 0, %s145
  $region4: #{particlenet_forward.2} parent=0 // loop_header_branch
    %14 = sbr.rel (%p12) target = $region8
  $region5: #{particlenet_forward.2} parent=0 // loop_body
    %s16 = ssub.s32 %s11, 1
    %s17 = ssub.s32 %s11, 2
    %s18 = sadd.s32 %s11, 1
    %s19 = ssub.s32 %s11, %s18
    %p20 = scmp.eq.s32.totalorder %s19, 0
    %s22 = sadd.s32 %s21, 1
    %s23 = scalar_select %p20, %s21, %s22
    %p26 = pneg %p20
    %p27 = scmp.eq.s32.totalorder %s11, 1
    %p28 = por %p26, %p27
    %p29 = scmp.ne.s32.totalorder %s21, %s24
    %p30 = scmp.eq.s32.totalorder %s11, 0
    %p31 = por %p29, %p30
    %p32 = scmp.ne.s32.totalorder %s21, %s24
    %p33 = scmp.eq.s32.totalorder %s16, 1
    %p34 = por %p32, %p33
    %p35 = scmp.ne.s32.totalorder %s24, %s25
    %p36 = scmp.eq.s32.totalorder %s16, 0
    %p37 = por %p35, %p36
    %p38 = scmp.ne.s32.totalorder %s24, %s25
    %p39 = scmp.eq.s32.totalorder %s17, 1
    %p40 = por %p38, %p39
    %p42 = scmp.ne.s32.totalorder %s25, %s41
    %p43 = scmp.eq.s32.totalorder %s17, 0
    %p44 = por %p42, %p43
    %s45 = ssub.s32 %s11, %s18
    %p46 = scmp.eq.s32.totalorder %s45, 0
    %s48 = sadd.s32 %s47, 1
    %s49 = scalar_select %p46, %s47, %s48
    %p52 = pneg %p46
    %p53 = scmp.eq.s32.totalorder %s11, 1
    %p54 = por %p52, %p53
    %p55 = scmp.ne.s32.totalorder %s47, %s50
    %p56 = scmp.eq.s32.totalorder %s11, 0
    %p57 = por %p55, %p56
    %p58 = scmp.ne.s32.totalorder %s47, %s50
    %p59 = scmp.eq.s32.totalorder %s16, 1
    %p60 = por %p58, %p59
    %p61 = scmp.ne.s32.totalorder %s50, %s51
    %p62 = scmp.eq.s32.totalorder %s16, 0
    %p63 = por %p61, %p62
    %p64 = scmp.ne.s32.totalorder %s50, %s51
    %p65 = scmp.eq.s32.totalorder %s17, 1
    %p66 = por %p64, %p65
    %p68 = scmp.ne.s32.totalorder %s51, %s67
    %p69 = scmp.eq.s32.totalorder %s17, 0
    %p70 = por %p68, %p69
    %s71 = ssub.s32 %s11, %s18
    %p72 = scmp.eq.s32.totalorder %s71, 0
    %s74 = sadd.s32 %s73, 1
    %s75 = scalar_select %p72, %s73, %s74
    %p78 = pneg %p72
    %p79 = scmp.eq.s32.totalorder %s11, 1
    %p80 = por %p78, %p79
    %p81 = scmp.ne.s32.totalorder %s73, %s76
    %p82 = scmp.eq.s32.totalorder %s11, 0
    %p83 = por %p81, %p82
    %p84 = scmp.ne.s32.totalorder %s73, %s76
    %p85 = scmp.eq.s32.totalorder %s16, 1
    %p86 = por %p84, %p85
    %p87 = scmp.ne.s32.totalorder %s76, %s77
    %p88 = scmp.eq.s32.totalorder %s16, 0
    %p89 = por %p87, %p88
    %p90 = scmp.ne.s32.totalorder %s76, %s77
    %p91 = scmp.eq.s32.totalorder %s17, 1
    %p92 = por %p90, %p91
    %p94 = scmp.ne.s32.totalorder %s77, %s93
    %p95 = scmp.eq.s32.totalorder %s17, 0
    %p96 = por %p94, %p95
    %s98 = sadd.s32 %s97, 1
    %p101 = scmp.eq.s32.totalorder %s11, 1
    %p102 = scmp.ne.s32.totalorder %s97, %s99
    %p103 = scmp.eq.s32.totalorder %s11, 0
    %p104 = por %p102, %p103
    %p105 = scmp.ne.s32.totalorder %s97, %s99
    %p106 = scmp.eq.s32.totalorder %s16, 1
    %p107 = por %p105, %p106
    %p108 = scmp.ne.s32.totalorder %s99, %s100
    %p109 = scmp.eq.s32.totalorder %s16, 0
    %p110 = por %p108, %p109
    %p111 = scmp.ne.s32.totalorder %s99, %s100
    %p112 = scmp.eq.s32.totalorder %s17, 1
    %p113 = por %p111, %p112
    %p115 = scmp.ne.s32.totalorder %s100, %s114
    %p116 = scmp.eq.s32.totalorder %s17, 0
    %p117 = por %p115, %p116
    %s119 = sadd.s32 %s118, 1
    %p122 = scmp.eq.s32.totalorder %s11, 1
    %p123 = scmp.ne.s32.totalorder %s118, %s120
    %p124 = scmp.eq.s32.totalorder %s11, 0
    %p125 = por %p123, %p124
    %p126 = scmp.ne.s32.totalorder %s118, %s120
    %p127 = scmp.eq.s32.totalorder %s16, 1
    %p128 = por %p126, %p127
    %p129 = scmp.ne.s32.totalorder %s120, %s121
    %p130 = scmp.eq.s32.totalorder %s16, 0
    %p131 = por %p129, %p130
    %p132 = scmp.ne.s32.totalorder %s120, %s121
    %p133 = scmp.eq.s32.totalorder %s17, 1
    %p134 = por %p132, %p133
    %p136 = scmp.ne.s32.totalorder %s121, %s135
    %p137 = scmp.eq.s32.totalorder %s17, 0
    %p138 = por %p136, %p137
    %s139 = ssub.s32 %s11, %s18
    %p140 = scmp.eq.s32.totalorder %s139, 0
    %s142 = sadd.s32 %s141, 1
    %s143 = scalar_select %p140, %s141, %s142
    %p146 = pneg %p140
    %p147 = scmp.eq.s32.totalorder %s11, 1
    %p148 = por %p146, %p147
    %p149 = scmp.ne.s32.totalorder %s141, %s144
    %p150 = scmp.eq.s32.totalorder %s11, 0
    %p151 = por %p149, %p150
    %p152 = scmp.ne.s32.totalorder %s141, %s144
    %p153 = scmp.eq.s32.totalorder %s16, 1
    %p154 = por %p152, %p153
    %p155 = scmp.ne.s32.totalorder %s144, %s145
    %p156 = scmp.eq.s32.totalorder %s16, 0
    %p157 = por %p155, %p156
    %p158 = scmp.ne.s32.totalorder %s144, %s145
    %p159 = scmp.eq.s32.totalorder %s17, 1
    %p160 = por %p158, %p159
    %p162 = scmp.ne.s32.totalorder %s145, %s161
    %p163 = scmp.eq.s32.totalorder %s17, 0
    %p164 = por %p162, %p163
    %p165 = scmp.le.s32.totalorder 1, %s11
    %p166 = scmp.lt.s32.totalorder %s11, 3
    %p167 = pnand %p165, %p166
    %p168 = pneg %p167
    // Predicated region
    $region9: #{particlenet_forward.2} parent=5 // pred_check
      _
    $region10: #{particlenet_forward.2} parent=5 // pred_check_branch
      %170 = sbr.rel (%p167) target = $region12
    $region11: #{particlenet_forward.2} parent=5 // pred_region
      %s171 = ssub.s32 %s11, 1
      // Predicated region
      $region13: #{particlenet_forward.2} parent=11 // pred_check
        %p172 = pneg %p110
      $region14: #{particlenet_forward.2} parent=11 // pred_check_branch
        %174 = sbr.rel (%p172) target = $region16
      $region15: #{particlenet_forward.2} parent=11 // pred_region
        _
      $region16: #{particlenet_forward.2} parent=11 // pred_fallthru
        _
      // Predicated region
      $region17: #{particlenet_forward.2} parent=11 // pred_check
        %p175 = pneg %p131
      $region18: #{particlenet_forward.2} parent=11 // pred_check_branch
        %177 = sbr.rel (%p175) target = $region20
      $region19: #{particlenet_forward.2} parent=11 // pred_region
        _
      $region20: #{particlenet_forward.2} parent=11 // pred_fallthru
        _
    $region12: #{particlenet_forward.2} parent=5 // pred_fallthru
      _
    %p178 = scmp.lt.s32.totalorder %s11, 2
    // Predicated region
    $region21: #{particlenet_forward.2} parent=5 // pred_check
      %p179 = pneg %p178
    $region22: #{particlenet_forward.2} parent=5 // pred_check_branch
      %181 = sbr.rel (%p179) target = $region24
    $region23: #{particlenet_forward.2} parent=5 // pred_region
      // Predicated region
      $region25: #{particlenet_forward.2} parent=23 // pred_check
        %p182 = pneg %p31
      $region26: #{particlenet_forward.2} parent=23 // pred_check_branch
        %184 = sbr.rel (%p182) target = $region28
      $region27: #{particlenet_forward.2} parent=23 // pred_region
        %p185 = scmp.lt.s32.totalorder %s11, 1
        %s186 = scalar_select %p185, %s11, 1
        %s187 = smul.addr %s186, 14
        %s188 = smul.addr %s187, 4
        %s189 = scalar_lea.vmem %s0, %s188
      $region28: #{particlenet_forward.2} parent=23 // pred_fallthru
        _
      // Predicated region
      $region29: #{particlenet_forward.2} parent=23 // pred_check
        %p190 = pneg %p57
      $region30: #{particlenet_forward.2} parent=23 // pred_check_branch
        %192 = sbr.rel (%p190) target = $region32
      $region31: #{particlenet_forward.2} parent=23 // pred_region
        %s193 = smul.u32 2, %s11
        %p194 = scmp.lt.s32.totalorder %s193, 3
        %s195 = scalar_select %p194, %s193, 3
        %s196 = smul.addr %s195, 8
        %s197 = scalar_lea.vmem %s1, %s196
        %s198 = smul.u32 2, %s11
      $region32: #{particlenet_forward.2} parent=23 // pred_fallthru
        _
      // Predicated region
      $region33: #{particlenet_forward.2} parent=23 // pred_check
        %p199 = pneg %p83
      $region34: #{particlenet_forward.2} parent=23 // pred_check_branch
        %201 = sbr.rel (%p199) target = $region36
      $region35: #{particlenet_forward.2} parent=23 // pred_region
        %s202 = smul.u32 2, %s11
        %p203 = scmp.lt.s32.totalorder %s202, 3
        %s204 = scalar_select %p203, %s202, 3
        %s205 = smul.addr %s204, 8
        %s206 = scalar_lea.vmem %s2, %s205
        %s207 = smul.u32 2, %s11
      $region36: #{particlenet_forward.2} parent=23 // pred_fallthru
        _
    $region24: #{particlenet_forward.2} parent=5 // pred_fallthru
      _
    %p208 = scmp.le.s32.totalorder 1, %s11
    %p209 = scmp.lt.s32.totalorder %s11, 3
    %p210 = pnand %p208, %p209
    %p211 = pneg %p210
    // Predicated region
    $region37: #{particlenet_forward.2} parent=5 // pred_check
      _
    $region38: #{particlenet_forward.2} parent=5 // pred_check_branch
      %213 = sbr.rel (%p210) target = $region40
    $region39: #{particlenet_forward.2} parent=5 // pred_region
      %s214 = ssub.s32 %s11, 1
      %p215 = scmp.lt.s32.totalorder %s16, 1
      %s216 = scalar_select %p215, %s16, 1
      %s217 = smul.addr %s216, 14
      %s218 = smul.addr %s217, 4
      %s219 = scalar_lea.vmem %s0, %s218
      %p220 = pneg %p37
      %p221 = pneg %p34
      %s222 = smul.u32 2, %s16
      %p223 = scmp.lt.s32.totalorder %s222, 3
      %s224 = scalar_select %p223, %s222, 3
      %s225 = smul.addr %s224, 8
      %s226 = scalar_lea.vmem %s1, %s225
      %p227 = pneg %p63
      %p228 = pneg %p60
      %s229 = smul.u32 2, %s16
      %p230 = scmp.lt.s32.totalorder %s229, 3
      %s231 = scalar_select %p230, %s229, 3
      %s232 = smul.addr %s231, 8
      %s233 = scalar_lea.vmem %s2, %s232
      %p234 = pneg %p89
      %p235 = pneg %p86
      %p236 = pneg %p110
      %p237 = pneg %p107
      %p238 = pneg %p131
      %p239 = pneg %p128
      %p240 = pneg %p157
      %p241 = pneg %p154
      %s242 = smul.u32 2, %s16
      %p243 = scmp.lt.s32.totalorder %s242, 3
      %s244 = scalar_select %p243, %s242, 3
      %s245 = smul.addr %s244, 8
      %s246 = scalar_lea.vmem %s5, %s245
      %p247 = scmp.lt.s32.totalorder %s16, 1
      %s248 = scalar_select %p247, %s16, 1
      %s249 = smul.addr %s248, 14
      %s250 = smul.addr %s249, 4
      %s251 = scalar_lea.vmem %s0, %s250
      %s252 = smul.u32 2, %s16
      %p253 = scmp.lt.s32.totalorder %s252, 3
      %s254 = scalar_select %p253, %s252, 3
      %s255 = smul.addr %s254, 8
      %s256 = scalar_lea.vmem %s1, %s255
      %s257 = smul.u32 2, %s16
      %s258 = smul.u32 2, %s16
      %p259 = scmp.lt.s32.totalorder %s258, 3
      %s260 = scalar_select %p259, %s258, 3
      %s261 = smul.addr %s260, 8
      %s262 = scalar_lea.vmem %s2, %s261
      %s263 = smul.u32 2, %s16
      %s264 = smul.u32 2, %s16
      %p265 = scmp.lt.s32.totalorder %s264, 3
      %s266 = scalar_select %p265, %s264, 3
      %s267 = smul.addr %s266, 8
      %s268 = scalar_lea.vmem %s5, %s267
      %s269 = smul.u32 2, %s16
      %v271 = vld [vmem:[%s256] sm:$0xff]
      %v272 = vld [vmem:[%s256 + $0x8] sm:$0xff]
      %v273 = vpack.c.bf16 %v272, %v271
      %v274 = vld [vmem:[%s262] sm:$0xff]
      %v275 = vld [vmem:[%s262 + $0x8] sm:$0xff]
      %v276 = vld [vmem:[%s3] sm:$0x3]
      %v277 = vld [vmem:[%s4] sm:$0x1]
      %v278 = vperm.slane %v277, 0
      %vm279 = vcmask 31744
      %v281 = vsel %vm279, %v273, 0
      %vm283 = vcmask 1041408
      %v285 = vsel %vm283, %v276, 0
      %287 = vmatpush.bf16.msra.mxu0 0
      %288 = vmatpush.bf16.msra.mxu0 0
      %289 = vmatpush.bf16.msra.mxu0 0
      %290 = vmatpush.bf16.msra.mxu0 0
      %291 = vmatpush.bf16.msra.mxu0 0
      %292 = vmatpush.bf16.msra.mxu0 0
      %293 = vmatpush.bf16.msra.mxu0 0
      %294 = vmatpush.bf16.msra.mxu0 %v285
      %295 = vmatmul.bf16.gmra.mxu0 %v281
      %v296 = vpop.f32.mrf.mxu0
      %v297 = vadd.f32 %v278, %v296
      %v298 = vpop.f32.mrf.mxu0
      %v299 = vadd.f32 %v278, %v298
      %300 = vdwg.mxu0
      %v301 = vld [vmem:[%s251] sm:$0xf]
      %v302 = vld [vmem:[%s251 + $0x4] sm:$0xf]
      %v303 = vld [vmem:[%s251 + $0x8] sm:$0xf]
      %v304 = vld [vmem:[%s251 + $0xc] sm:$0xf]
      %v305 = vld [vmem:[%s251 + $0x10] sm:$0xf]
      %v306 = vld [vmem:[%s251 + $0x14] sm:$0xf]
      %v307 = vld [vmem:[%s251 + $0x18] sm:$0xf]
      %v308 = vld [vmem:[%s251 + $0x1c] sm:$0xf]
      %v309 = vld [vmem:[%s251 + $0x20] sm:$0xf]
      %v310 = vld [vmem:[%s251 + $0x24] sm:$0xf]
      %v311 = vld [vmem:[%s251 + $0x28] sm:$0xf]
      %v312 = vld [vmem:[%s251 + $0x2c] sm:$0xf]
      %v313 = vld [vmem:[%s251 + $0x30] sm:$0xf]
      %v314 = vld [vmem:[%s251 + $0x34] sm:$0xf]
      %v315 = vld [vmem:[%s3 + $0x8] sm:$0x3]
      %v330 = vunpack.c.l.b16 %v301
      %v331 = vunpack.c.l.b16 %v302
      %v332 = vunpack.c.l.b16 %v303
      %v333 = vunpack.c.l.b16 %v304
      %v334 = vunpack.c.l.b16 %v305
      %v335 = vunpack.c.l.b16 %v306
      %v336 = vunpack.c.l.b16 %v307
      %v337 = vunpack.c.l.b16 %v308
      %v338 = vunpack.c.l.b16 %v309
      %v339 = vunpack.c.l.b16 %v310
      %v340 = vunpack.c.l.b16 %v311
      %v341 = vunpack.c.l.b16 %v312
      %v342 = vunpack.c.l.b16 %v313
      %v343 = vunpack.c.l.b16 %v314
      %v344 = vpack.c.b16 %v331, %v330
      %v345 = vpack.c.b16 %v333, %v332
      %v346 = vpack.c.b16 %v335, %v334
      %v347 = vpack.c.b16 %v337, %v336
      %v348 = vpack.c.b16 %v339, %v338
      %v349 = vpack.c.b16 %v341, %v340
      %v350 = vpack.c.b16 %v343, %v342
      %v352 = vsel %vm279, %v344, 0
      %v355 = vsel %vm279, %v345, 0
      %v358 = vsel %vm279, %v346, 0
      %v361 = vsel %vm279, %v347, 0
      %v364 = vsel %vm279, %v348, 0
      %v367 = vsel %vm279, %v349, 0
      %v370 = vsel %vm279, %v350, 0
      %v373 = vsel %vm283, %v315, 0
      %375 = vmatpush.bf16.msra.mxu0 0
      %376 = vmatpush.bf16.msra.mxu0 0
      %377 = vmatpush.bf16.msra.mxu0 0
      %378 = vmatpush.bf16.msra.mxu0 0
      %379 = vmatpush.bf16.msra.mxu0 0
      %380 = vmatpush.bf16.msra.mxu0 0
      %381 = vmatpush.bf16.msra.mxu0 0
      %382 = vmatpush.bf16.msra.mxu0 %v373
      %383 = vmatmul.bf16.gmra.mxu0 %v352
      %v384 = vpop.f32.mrf.mxu0
      %v385 = vadd.f32 0.0, %v384
      %v386 = vpop.f32.mrf.mxu0
      %v387 = vadd.f32 0.0, %v386
      %388 = vmatmul.bf16.gmra.mxu0 %v355
      %v389 = vpop.f32.mrf.mxu0
      %v390 = vadd.f32 0.0, %v389
      %v391 = vpop.f32.mrf.mxu0
      %v392 = vadd.f32 0.0, %v391
      %393 = vmatmul.bf16.gmra.mxu0 %v358
      %v394 = vpop.f32.mrf.mxu0
      %v395 = vadd.f32 0.0, %v394
      %v396 = vpop.f32.mrf.mxu0
      %v397 = vadd.f32 0.0, %v396
      %398 = vmatmul.bf16.gmra.mxu0 %v361
      %v399 = vpop.f32.mrf.mxu0
      %v400 = vadd.f32 0.0, %v399
      %v401 = vpop.f32.mrf.mxu0
      %v402 = vadd.f32 0.0, %v401
      %403 = vmatmul.bf16.gmra.mxu0 %v364
      %v404 = vpop.f32.mrf.mxu0
      %v405 = vadd.f32 0.0, %v404
      %v406 = vpop.f32.mrf.mxu0
      %v407 = vadd.f32 0.0, %v406
      %408 = vmatmul.bf16.gmra.mxu0 %v367
      %v409 = vpop.f32.mrf.mxu0
      %v410 = vadd.f32 0.0, %v409
      %v411 = vpop.f32.mrf.mxu0
      %v412 = vadd.f32 0.0, %v411
      %413 = vmatmul.bf16.gmra.mxu0 %v370
      %v414 = vpop.f32.mrf.mxu0
      %v415 = vadd.f32 0.0, %v414
      %v416 = vpop.f32.mrf.mxu0
      %v417 = vadd.f32 0.0, %v416
      %418 = vdwg.mxu0
      %v419 = vadd.f32 %v385, %v297
      %v420 = vadd.f32 %v387, %v299
      %v421 = vadd.f32 %v390, %v297
      %v422 = vadd.f32 %v392, %v299
      %v423 = vadd.f32 %v395, %v297
      %v424 = vadd.f32 %v397, %v299
      %v425 = vadd.f32 %v400, %v297
      %v426 = vadd.f32 %v402, %v299
      %v427 = vadd.f32 %v405, %v297
      %v428 = vadd.f32 %v407, %v299
      %v429 = vadd.f32 %v410, %v297
      %v430 = vadd.f32 %v412, %v299
      %v431 = vadd.f32 %v415, %v297
      %v432 = vadd.f32 %v417, %v299
      %v433 = vmax.f32 %v419, 0.0
      %v434 = vmax.f32 %v420, 0.0
      %v435 = vmax.f32 %v421, 0.0
      %v436 = vmax.f32 %v422, 0.0
      %v437 = vmax.f32 %v423, 0.0
      %v438 = vmax.f32 %v424, 0.0
      %v439 = vmax.f32 %v425, 0.0
      %v440 = vmax.f32 %v426, 0.0
      %v441 = vmax.f32 %v427, 0.0
      %v442 = vmax.f32 %v428, 0.0
      %v443 = vmax.f32 %v429, 0.0
      %v444 = vmax.f32 %v430, 0.0
      %v445 = vmax.f32 %v431, 0.0
      %v446 = vmax.f32 %v432, 0.0
      %v447 = vpack.c.bf16 %v434, %v433
      %v448 = vpack.c.bf16 %v436, %v435
      %v449 = vpack.c.bf16 %v438, %v437
      %v450 = vpack.c.bf16 %v440, %v439
      %v451 = vpack.c.bf16 %v442, %v441
      %v452 = vpack.c.bf16 %v444, %v443
      %v453 = vpack.c.bf16 %v446, %v445
      %v454 = vld [vmem:[%s3 + $0x10] sm:$0xf]
      %v455 = vld [vmem:[%s3 + $0x14] sm:$0xf]
      %v456 = vld [vmem:[%s3 + $0x18] sm:$0xf]
      %v457 = vld [vmem:[%s3 + $0x1c] sm:$0xf]
      %v458 = vld [vmem:[%s4 + $0x1] sm:$0x1]
      %v459 = vperm.slane %v458, 0
      %v464 = vunpack.c.l.b16 %v454
      %v465 = vunpack.c.l.b16 %v455
      %v466 = vunpack.c.l.b16 %v456
      %v467 = vunpack.c.l.b16 %v457
      %v468 = vpack.c.b16 %v465, %v464
      %v469 = vpack.c.b16 %v467, %v466
      %vm472 = vcmask 261120
      %v474 = vsel %vm472, %v447, 0
      %v477 = vsel %vm472, %v448, 0
      %v480 = vsel %vm472, %v449, 0
      %v483 = vsel %vm472, %v450, 0
      %v486 = vsel %vm472, %v451, 0
      %v489 = vsel %vm472, %v452, 0
      %v492 = vsel %vm472, %v453, 0
      %494 = vmatpush.bf16.msra.mxu0 0
      %495 = vmatpush.bf16.msra.mxu0 0
      %496 = vmatpush.bf16.msra.mxu0 0
      %497 = vmatpush.bf16.msra.mxu0 0
      %498 = vmatpush.bf16.msra.mxu0 0
      %499 = vmatpush.bf16.msra.mxu0 0
      %500 = vmatpush.bf16.msra.mxu0 %v469
      %501 = vmatpush.bf16.msra.mxu0 %v468
      %502 = vmatmul.bf16.gmra.mxu0 %v474
      %v503 = vpop.f32.mrf.mxu0
      %v504 = vadd.f32 %v459, %v503
      %v505 = vpop.f32.mrf.mxu0
      %v506 = vadd.f32 %v459, %v505
      %507 = vmatmul.bf16.gmra.mxu0 %v477
      %v508 = vpop.f32.mrf.mxu0
      %v509 = vadd.f32 %v459, %v508
      %v510 = vpop.f32.mrf.mxu0
      %v511 = vadd.f32 %v459, %v510
      %512 = vmatmul.bf16.gmra.mxu0 %v480
      %v513 = vpop.f32.mrf.mxu0
      %v514 = vadd.f32 %v459, %v513
      %v515 = vpop.f32.mrf.mxu0
      %v516 = vadd.f32 %v459, %v515
      %517 = vmatmul.bf16.gmra.mxu0 %v483
      %v518 = vpop.f32.mrf.mxu0
      %v519 = vadd.f32 %v459, %v518
      %v520 = vpop.f32.mrf.mxu0
      %v521 = vadd.f32 %v459, %v520
      %522 = vmatmul.bf16.gmra.mxu0 %v486
      %v523 = vpop.f32.mrf.mxu0
      %v524 = vadd.f32 %v459, %v523
      %v525 = vpop.f32.mrf.mxu0
      %v526 = vadd.f32 %v459, %v525
      %527 = vmatmul.bf16.gmra.mxu0 %v489
      %v528 = vpop.f32.mrf.mxu0
      %v529 = vadd.f32 %v459, %v528
      %v530 = vpop.f32.mrf.mxu0
      %v531 = vadd.f32 %v459, %v530
      %532 = vmatmul.bf16.gmra.mxu0 %v492
      %v533 = vpop.f32.mrf.mxu0
      %v534 = vadd.f32 %v459, %v533
      %v535 = vpop.f32.mrf.mxu0
      %v536 = vadd.f32 %v459, %v535
      %537 = vdwg.mxu0
      %v538 = vmax.f32 %v504, 0.0
      %v539 = vmax.f32 %v506, 0.0
      %v540 = vmax.f32 %v509, 0.0
      %v541 = vmax.f32 %v511, 0.0
      %v542 = vmax.f32 %v514, 0.0
      %v543 = vmax.f32 %v516, 0.0
      %v544 = vmax.f32 %v519, 0.0
      %v545 = vmax.f32 %v521, 0.0
      %v546 = vmax.f32 %v524, 0.0
      %v547 = vmax.f32 %v526, 0.0
      %v548 = vmax.f32 %v529, 0.0
      %v549 = vmax.f32 %v531, 0.0
      %v550 = vmax.f32 %v534, 0.0
      %v551 = vmax.f32 %v536, 0.0
      %v552 = vpack.c.bf16 %v539, %v538
      %v553 = vpack.c.bf16 %v541, %v540
      %v554 = vpack.c.bf16 %v543, %v542
      %v555 = vpack.c.bf16 %v545, %v544
      %v556 = vpack.c.bf16 %v547, %v546
      %v557 = vpack.c.bf16 %v549, %v548
      %v558 = vpack.c.bf16 %v551, %v550
      %v559 = vld [vmem:[%s3 + $0x20] sm:$0xf]
      %v560 = vld [vmem:[%s3 + $0x24] sm:$0xf]
      %v561 = vld [vmem:[%s3 + $0x28] sm:$0xf]
      %v562 = vld [vmem:[%s3 + $0x2c] sm:$0xf]
      %v563 = vld [vmem:[%s4 + $0x2] sm:$0x1]
      %v564 = vperm.slane %v563, 0
      %v569 = vunpack.c.l.b16 %v559
      %v570 = vunpack.c.l.b16 %v560
      %v571 = vunpack.c.l.b16 %v561
      %v572 = vunpack.c.l.b16 %v562
      %v573 = vpack.c.b16 %v570, %v569
      %v574 = vpack.c.b16 %v572, %v571
      %v578 = vsel %vm472, %v552, 0
      %v581 = vsel %vm472, %v553, 0
      %v584 = vsel %vm472, %v554, 0
      %v587 = vsel %vm472, %v555, 0
      %v590 = vsel %vm472, %v556, 0
      %v593 = vsel %vm472, %v557, 0
      %v596 = vsel %vm472, %v558, 0
      %598 = vmatpush.bf16.msra.mxu0 0
      %599 = vmatpush.bf16.msra.mxu0 0
      %600 = vmatpush.bf16.msra.mxu0 0
      %601 = vmatpush.bf16.msra.mxu0 0
      %602 = vmatpush.bf16.msra.mxu0 0
      %603 = vmatpush.bf16.msra.mxu0 0
      %604 = vmatpush.bf16.msra.mxu0 %v574
      %605 = vmatpush.bf16.msra.mxu0 %v573
      %606 = vmatmul.bf16.gmra.mxu0 %v578
      %v607 = vpop.f32.mrf.mxu0
      %v608 = vadd.f32 %v564, %v607
      %v609 = vpop.f32.mrf.mxu0
      %v610 = vadd.f32 %v564, %v609
      %611 = vmatmul.bf16.gmra.mxu0 %v581
      %v612 = vpop.f32.mrf.mxu0
      %v613 = vadd.f32 %v564, %v612
      %v614 = vpop.f32.mrf.mxu0
      %v615 = vadd.f32 %v564, %v614
      %616 = vmatmul.bf16.gmra.mxu0 %v584
      %v617 = vpop.f32.mrf.mxu0
      %v618 = vadd.f32 %v564, %v617
      %v619 = vpop.f32.mrf.mxu0
      %v620 = vadd.f32 %v564, %v619
      %621 = vmatmul.bf16.gmra.mxu0 %v587
      %v622 = vpop.f32.mrf.mxu0
      %v623 = vadd.f32 %v564, %v622
      %v624 = vpop.f32.mrf.mxu0
      %v625 = vadd.f32 %v564, %v624
      %626 = vmatmul.bf16.gmra.mxu0 %v590
      %v627 = vpop.f32.mrf.mxu0
      %v628 = vadd.f32 %v564, %v627
      %v629 = vpop.f32.mrf.mxu0
      %v630 = vadd.f32 %v564, %v629
      %631 = vmatmul.bf16.gmra.mxu0 %v593
      %v632 = vpop.f32.mrf.mxu0
      %v633 = vadd.f32 %v564, %v632
      %v634 = vpop.f32.mrf.mxu0
      %v635 = vadd.f32 %v564, %v634
      %636 = vmatmul.bf16.gmra.mxu0 %v596
      %v637 = vpop.f32.mrf.mxu0
      %v638 = vadd.f32 %v564, %v637
      %v639 = vpop.f32.mrf.mxu0
      %v640 = vadd.f32 %v564, %v639
      %641 = vdwg.mxu0
      %v642 = vmax.f32 %v608, 0.0
      %v643 = vmax.f32 %v610, 0.0
      %v644 = vmax.f32 %v613, 0.0
      %v645 = vmax.f32 %v615, 0.0
      %v646 = vmax.f32 %v618, 0.0
      %v647 = vmax.f32 %v620, 0.0
      %v648 = vmax.f32 %v623, 0.0
      %v649 = vmax.f32 %v625, 0.0
      %v650 = vmax.f32 %v628, 0.0
      %v651 = vmax.f32 %v630, 0.0
      %v652 = vmax.f32 %v633, 0.0
      %v653 = vmax.f32 %v635, 0.0
      %v654 = vmax.f32 %v638, 0.0
      %v655 = vmax.f32 %v640, 0.0
      %v656 = vsel %vm472, %v642, 0.0
      %v657 = vsel %vm472, %v644, 0.0
      %v658 = vadd.f32 %v656, %v657
      %v659 = vsel %vm472, %v646, 0.0
      %v660 = vadd.f32 %v658, %v659
      %v661 = vsel %vm472, %v648, 0.0
      %v662 = vadd.f32 %v660, %v661
      %v663 = vsel %vm472, %v650, 0.0
      %v664 = vadd.f32 %v662, %v663
      %v665 = vsel %vm472, %v652, 0.0
      %v666 = vadd.f32 %v664, %v665
      %v667 = vsel %vm472, %v654, 0.0
      %v668 = vadd.f32 %v666, %v667
      %v669 = vsel %vm472, %v643, 0.0
      %v670 = vsel %vm472, %v645, 0.0
      %v671 = vadd.f32 %v669, %v670
      %v672 = vsel %vm472, %v647, 0.0
      %v673 = vadd.f32 %v671, %v672
      %v674 = vsel %vm472, %v649, 0.0
      %v675 = vadd.f32 %v673, %v674
      %v676 = vsel %vm472, %v651, 0.0
      %v677 = vadd.f32 %v675, %v676
      %v678 = vsel %vm472, %v653, 0.0
      %v679 = vadd.f32 %v677, %v678
      %v680 = vsel %vm472, %v655, 0.0
      %v681 = vadd.f32 %v679, %v680
      %v682 = vmul.f32 %v668, 0.14285715
      %v683 = vmul.f32 %v681, 0.14285715
      %686 = vrot.lane.b32.xlu0 %v682, 32
      %v687 = vpop.permute.xlu0 %686
      %688 = vrot.lane.b32.xlu0 %v683, 32
      %v689 = vpop.permute.xlu0 %688
      %v692 = vadd.f32 %v297, %v687
      %v693 = vadd.f32 %v299, %v689
      %v694 = vmax.f32 %v692, 0.0
      %v695 = vmax.f32 %v693, 0.0
      %697 = vset.pattern.permute.xlu0 0
      %698 = vperm.xlu0 %697, %v274
      %v699 = vpop.permute.xlu0 %698
      %702 = vset.pattern.permute.xlu0 0
      %703 = vperm.xlu0 %702, %v275
      %v704 = vpop.permute.xlu0 %703
      %v706 = vmul.f32 %v694, %v699
      %v707 = vmul.f32 %v695, %v704
      %710 = vrot.lane.b32.xlu0 %v706, 96
      %v711 = vpop.permute.xlu0 %710
      %712 = vrot.lane.b32.xlu0 %v707, 96
      %v713 = vpop.permute.xlu0 %712
      %716 = vst.msk [vmem:[%s268] sm:$0xff] %vm472, %v711
      %717 = vst.msk [vmem:[%s268 + $0x8] sm:$0xff] %vm472, %v713
      %s718 = smul.u32 2, %s16
      %p719 = scmp.lt.s32.totalorder %s718, 3
      %s720 = scalar_select %p719, %s718, 3
      %s721 = smul.addr %s720, 8
      %s722 = scalar_lea.vmem %s5, %s721
      // Predicated region
      $region41: #{particlenet_forward.2} parent=39 // pred_check
        %p723 = pneg %p154
      $region42: #{particlenet_forward.2} parent=39 // pred_check_branch
        %725 = sbr.rel (%p723) target = $region44
      $region43: #{particlenet_forward.2} parent=39 // pred_region
        %s726 = smul.u32 2, %s16
      $region44: #{particlenet_forward.2} parent=39 // pred_fallthru
        _
    $region40: #{particlenet_forward.2} parent=5 // pred_fallthru
      _
    %p727 = scmp.le.s32.totalorder 2, %s11
    // Predicated region
    $region45: #{particlenet_forward.2} parent=5 // pred_check
      %p728 = pneg %p727
    $region46: #{particlenet_forward.2} parent=5 // pred_check_branch
      %730 = sbr.rel (%p728) target = $region48
    $region47: #{particlenet_forward.2} parent=5 // pred_region
      %s731 = ssub.s32 %s11, 2
      // Predicated region
      $region49: #{particlenet_forward.2} parent=47 // pred_check
        %p732 = pneg %p160
      $region50: #{particlenet_forward.2} parent=47 // pred_check_branch
        %734 = sbr.rel (%p732) target = $region52
      $region51: #{particlenet_forward.2} parent=47 // pred_region
        %s735 = smul.u32 2, %s17
        %p736 = scmp.lt.s32.totalorder %s735, 3
        %s737 = scalar_select %p736, %s735, 3
        %s738 = smul.addr %s737, 8
        %s739 = scalar_lea.vmem %s5, %s738
      $region52: #{particlenet_forward.2} parent=47 // pred_fallthru
        _
    $region48: #{particlenet_forward.2} parent=5 // pred_fallthru
      _
  $region6: #{particlenet_forward.2} parent=0 // loop_footer
    %s15 = sadd.s32 1, %s11
  $region7: #{particlenet_forward.2} parent=0 // loop_footer_branch
    %10 = sbr.rel target = $region3
  $region8: #{particlenet_forward.2} parent=0 // loop_exit
    _

// kernel: particlenet_forward.3
$region0: #{particlenet_forward.3}
  #allocation0 [shape = 'u32[]', space=smem, size = 0x4, offset = 0x4, fixed_abs, tag = 'smem constant byte address 0x4 - core index']
  #allocation1 [shape = 'u32[72,128]{1,0:T(1,128)}', space=vmem, size = 0x9000, scoped, tag = 'internal scratch']
  %s0 = inlined_call_operand.vmem [shape: bf16[2,7,16,32], index: 0, kind: input, shape index: {}]
  %s1 = inlined_call_operand.vmem [shape: f32[32,32], index: 1, kind: input, shape index: {}]
  %s2 = inlined_call_operand.vmem [shape: f32[32,1], index: 2, kind: input, shape index: {}]
  %s3 = inlined_call_operand.vmem [shape: f32[32,1], index: 3, kind: input, shape index: {}]
  %s4 = inlined_call_operand.vmem [shape: bf16[192,128], index: 4, kind: input, shape index: {}]
  %s5 = inlined_call_operand.vmem [shape: f32[3,128], index: 5, kind: input, shape index: {}]
  %s6 = inlined_call_operand.vmem [shape: bf16[96,128], index: 6, kind: input, shape index: {}]
  %s7 = inlined_call_operand.vmem [shape: f32[1,128], index: 7, kind: input, shape index: {}]
  %s8 = inlined_call_operand.vmem [shape: bf16[128,128], index: 8, kind: input, shape index: {}]
  %s9 = inlined_call_operand.vmem [shape: f32[1,128], index: 9, kind: input, shape index: {}]
  %s10 = inlined_call_operand.vmem [shape: bf16[128,5], index: 10, kind: input, shape index: {}]
  %s11 = inlined_call_operand.vmem [shape: f32[1,5], index: 11, kind: input, shape index: {}]
  %s12 = inlined_call_operand.hbm [shape: f32[2,1,5], index: 12, kind: output, shape index: {}]
  %s13 = sld [smem:[#allocation0]]
  $region81: #{particlenet_forward.3} parent=0
    _
  %s15 = ssub.s32 1, %s13
  %s16 = scalar_select 0, %s15, %s13
  $region1: #{particlenet_forward.3} parent=0
    #allocation2 [shape = 'u8[1024]{0}', space=vmem, size = 0x400, scoped, tag = 'output window, operand 0']
    #allocation3 [shape = 's32[2]{0}', space=sflag, size = 0x8, scoped, tag = 'scoped memory for particlenet_forward.3']
    %17 = vsyncpa [#allocation3], 0
    %s18 = scalar_lea.sflag [#allocation3], 1
    %19 = vsyncpa %s18, 0
    loop: start=0, step=1, limit=4
    $region2: #{particlenet_forward.3} parent=1 // loop_pre_header
      _
    $region3: #{particlenet_forward.3} parent=1 // loop_header
      %s21 = sphi 0, %s25
      %p22 = scmp.ge.s32.totalorder %s21, 4
      %s31 = sphi 0, %s33
      %s34 = sphi 0, %s31
      %s35 = sphi 0, %s34
      %s51 = sphi 0, %s35
      %s57 = sphi 0, %s59
      %s60 = sphi 0, %s57
      %s61 = sphi 0, %s60
      %s77 = sphi 0, %s61
      %s83 = sphi 0, %s85
      %s86 = sphi 0, %s83
      %s87 = sphi 0, %s86
      %s103 = sphi 0, %s87
      %s109 = sphi 0, %s111
      %s112 = sphi 0, %s109
      %s113 = sphi 0, %s112
      %s129 = sphi 0, %s113
      %s133 = sphi 0, %s133
      %s135 = sphi 0, %s133
      %s136 = sphi 0, %s135
      %s150 = sphi 0, %s136
      %s154 = sphi 0, %s154
      %s156 = sphi 0, %s154
      %s157 = sphi 0, %s156
      %s171 = sphi 0, %s157
      %s175 = sphi 0, %s175
      %s177 = sphi 0, %s175
      %s178 = sphi 0, %s177
      %s192 = sphi 0, %s178
      %s196 = sphi 0, %s196
      %s198 = sphi 0, %s196
      %s199 = sphi 0, %s198
      %s213 = sphi 0, %s199
      %s217 = sphi 0, %s217
      %s219 = sphi 0, %s217
      %s220 = sphi 0, %s219
      %s234 = sphi 0, %s220
      %s238 = sphi 0, %s238
      %s240 = sphi 0, %s238
      %s241 = sphi 0, %s240
      %s255 = sphi 0, %s241
      %s259 = sphi 0, %s259
      %s261 = sphi 0, %s259
      %s262 = sphi 0, %s261
      %s276 = sphi 0, %s262
      %s280 = sphi 0, %s280
      %s282 = sphi 0, %s280
      %s283 = sphi 0, %s282
      %s297 = sphi 0, %s283
      %s303 = sphi 0, %s305
      %s306 = sphi 0, %s303
      %s307 = sphi 0, %s306
      %s323 = sphi 0, %s307
    $region4: #{particlenet_forward.3} parent=1 // loop_header_branch
      %24 = sbr.rel (%p22) target = $region8
    $region5: #{particlenet_forward.3} parent=1 // loop_body
      %s26 = ssub.s32 %s21, 1
      %s27 = ssub.s32 %s21, 2
      %s28 = sadd.s32 %s21, 1
      %s29 = ssub.s32 %s21, %s28
      %p30 = scmp.eq.s32.totalorder %s29, 0
      %s32 = sadd.s32 %s31, 1
      %s33 = scalar_select %p30, %s31, %s32
      %p36 = pneg %p30
      %p37 = scmp.eq.s32.totalorder %s21, 1
      %p38 = por %p36, %p37
      %p39 = scmp.ne.s32.totalorder %s31, %s34
      %p40 = scmp.eq.s32.totalorder %s21, 0
      %p41 = por %p39, %p40
      %p42 = scmp.ne.s32.totalorder %s31, %s34
      %p43 = scmp.eq.s32.totalorder %s26, 1
      %p44 = por %p42, %p43
      %p45 = scmp.ne.s32.totalorder %s34, %s35
      %p46 = scmp.eq.s32.totalorder %s26, 0
      %p47 = por %p45, %p46
      %p48 = scmp.ne.s32.totalorder %s34, %s35
      %p49 = scmp.eq.s32.totalorder %s27, 1
      %p50 = por %p48, %p49
      %p52 = scmp.ne.s32.totalorder %s35, %s51
      %p53 = scmp.eq.s32.totalorder %s27, 0
      %p54 = por %p52, %p53
      %s55 = ssub.s32 %s21, %s28
      %p56 = scmp.eq.s32.totalorder %s55, 0
      %s58 = sadd.s32 %s57, 1
      %s59 = scalar_select %p56, %s57, %s58
      %p62 = pneg %p56
      %p63 = scmp.eq.s32.totalorder %s21, 1
      %p64 = por %p62, %p63
      %p65 = scmp.ne.s32.totalorder %s57, %s60
      %p66 = scmp.eq.s32.totalorder %s21, 0
      %p67 = por %p65, %p66
      %p68 = scmp.ne.s32.totalorder %s57, %s60
      %p69 = scmp.eq.s32.totalorder %s26, 1
      %p70 = por %p68, %p69
      %p71 = scmp.ne.s32.totalorder %s60, %s61
      %p72 = scmp.eq.s32.totalorder %s26, 0
      %p73 = por %p71, %p72
      %p74 = scmp.ne.s32.totalorder %s60, %s61
      %p75 = scmp.eq.s32.totalorder %s27, 1
      %p76 = por %p74, %p75
      %p78 = scmp.ne.s32.totalorder %s61, %s77
      %p79 = scmp.eq.s32.totalorder %s27, 0
      %p80 = por %p78, %p79
      %s81 = ssub.s32 %s21, %s28
      %p82 = scmp.eq.s32.totalorder %s81, 0
      %s84 = sadd.s32 %s83, 1
      %s85 = scalar_select %p82, %s83, %s84
      %p88 = pneg %p82
      %p89 = scmp.eq.s32.totalorder %s21, 1
      %p90 = por %p88, %p89
      %p91 = scmp.ne.s32.totalorder %s83, %s86
      %p92 = scmp.eq.s32.totalorder %s21, 0
      %p93 = por %p91, %p92
      %p94 = scmp.ne.s32.totalorder %s83, %s86
      %p95 = scmp.eq.s32.totalorder %s26, 1
      %p96 = por %p94, %p95
      %p97 = scmp.ne.s32.totalorder %s86, %s87
      %p98 = scmp.eq.s32.totalorder %s26, 0
      %p99 = por %p97, %p98
      %p100 = scmp.ne.s32.totalorder %s86, %s87
      %p101 = scmp.eq.s32.totalorder %s27, 1
      %p102 = por %p100, %p101
      %p104 = scmp.ne.s32.totalorder %s87, %s103
      %p105 = scmp.eq.s32.totalorder %s27, 0
      %p106 = por %p104, %p105
      %s107 = ssub.s32 %s21, %s28
      %p108 = scmp.eq.s32.totalorder %s107, 0
      %s110 = sadd.s32 %s109, 1
      %s111 = scalar_select %p108, %s109, %s110
      %p114 = pneg %p108
      %p115 = scmp.eq.s32.totalorder %s21, 1
      %p116 = por %p114, %p115
      %p117 = scmp.ne.s32.totalorder %s109, %s112
      %p118 = scmp.eq.s32.totalorder %s21, 0
      %p119 = por %p117, %p118
      %p120 = scmp.ne.s32.totalorder %s109, %s112
      %p121 = scmp.eq.s32.totalorder %s26, 1
      %p122 = por %p120, %p121
      %p123 = scmp.ne.s32.totalorder %s112, %s113
      %p124 = scmp.eq.s32.totalorder %s26, 0
      %p125 = por %p123, %p124
      %p126 = scmp.ne.s32.totalorder %s112, %s113
      %p127 = scmp.eq.s32.totalorder %s27, 1
      %p128 = por %p126, %p127
      %p130 = scmp.ne.s32.totalorder %s113, %s129
      %p131 = scmp.eq.s32.totalorder %s27, 0
      %p132 = por %p130, %p131
      %s134 = sadd.s32 %s133, 1
      %p137 = scmp.eq.s32.totalorder %s21, 1
      %p138 = scmp.ne.s32.totalorder %s133, %s135
      %p139 = scmp.eq.s32.totalorder %s21, 0
      %p140 = por %p138, %p139
      %p141 = scmp.ne.s32.totalorder %s133, %s135
      %p142 = scmp.eq.s32.totalorder %s26, 1
      %p143 = por %p141, %p142
      %p144 = scmp.ne.s32.totalorder %s135, %s136
      %p145 = scmp.eq.s32.totalorder %s26, 0
      %p146 = por %p144, %p145
      %p147 = scmp.ne.s32.totalorder %s135, %s136
      %p148 = scmp.eq.s32.totalorder %s27, 1
      %p149 = por %p147, %p148
      %p151 = scmp.ne.s32.totalorder %s136, %s150
      %p152 = scmp.eq.s32.totalorder %s27, 0
      %p153 = por %p151, %p152
      %s155 = sadd.s32 %s154, 1
      %p158 = scmp.eq.s32.totalorder %s21, 1
      %p159 = scmp.ne.s32.totalorder %s154, %s156
      %p160 = scmp.eq.s32.totalorder %s21, 0
      %p161 = por %p159, %p160
      %p162 = scmp.ne.s32.totalorder %s154, %s156
      %p163 = scmp.eq.s32.totalorder %s26, 1
      %p164 = por %p162, %p163
      %p165 = scmp.ne.s32.totalorder %s156, %s157
      %p166 = scmp.eq.s32.totalorder %s26, 0
      %p167 = por %p165, %p166
      %p168 = scmp.ne.s32.totalorder %s156, %s157
      %p169 = scmp.eq.s32.totalorder %s27, 1
      %p170 = por %p168, %p169
      %p172 = scmp.ne.s32.totalorder %s157, %s171
      %p173 = scmp.eq.s32.totalorder %s27, 0
      %p174 = por %p172, %p173
      %s176 = sadd.s32 %s175, 1
      %p179 = scmp.eq.s32.totalorder %s21, 1
      %p180 = scmp.ne.s32.totalorder %s175, %s177
      %p181 = scmp.eq.s32.totalorder %s21, 0
      %p182 = por %p180, %p181
      %p183 = scmp.ne.s32.totalorder %s175, %s177
      %p184 = scmp.eq.s32.totalorder %s26, 1
      %p185 = por %p183, %p184
      %p186 = scmp.ne.s32.totalorder %s177, %s178
      %p187 = scmp.eq.s32.totalorder %s26, 0
      %p188 = por %p186, %p187
      %p189 = scmp.ne.s32.totalorder %s177, %s178
      %p190 = scmp.eq.s32.totalorder %s27, 1
      %p191 = por %p189, %p190
      %p193 = scmp.ne.s32.totalorder %s178, %s192
      %p194 = scmp.eq.s32.totalorder %s27, 0
      %p195 = por %p193, %p194
      %s197 = sadd.s32 %s196, 1
      %p200 = scmp.eq.s32.totalorder %s21, 1
      %p201 = scmp.ne.s32.totalorder %s196, %s198
      %p202 = scmp.eq.s32.totalorder %s21, 0
      %p203 = por %p201, %p202
      %p204 = scmp.ne.s32.totalorder %s196, %s198
      %p205 = scmp.eq.s32.totalorder %s26, 1
      %p206 = por %p204, %p205
      %p207 = scmp.ne.s32.totalorder %s198, %s199
      %p208 = scmp.eq.s32.totalorder %s26, 0
      %p209 = por %p207, %p208
      %p210 = scmp.ne.s32.totalorder %s198, %s199
      %p211 = scmp.eq.s32.totalorder %s27, 1
      %p212 = por %p210, %p211
      %p214 = scmp.ne.s32.totalorder %s199, %s213
      %p215 = scmp.eq.s32.totalorder %s27, 0
      %p216 = por %p214, %p215
      %s218 = sadd.s32 %s217, 1
      %p221 = scmp.eq.s32.totalorder %s21, 1
      %p222 = scmp.ne.s32.totalorder %s217, %s219
      %p223 = scmp.eq.s32.totalorder %s21, 0
      %p224 = por %p222, %p223
      %p225 = scmp.ne.s32.totalorder %s217, %s219
      %p226 = scmp.eq.s32.totalorder %s26, 1
      %p227 = por %p225, %p226
      %p228 = scmp.ne.s32.totalorder %s219, %s220
      %p229 = scmp.eq.s32.totalorder %s26, 0
      %p230 = por %p228, %p229
      %p231 = scmp.ne.s32.totalorder %s219, %s220
      %p232 = scmp.eq.s32.totalorder %s27, 1
      %p233 = por %p231, %p232
      %p235 = scmp.ne.s32.totalorder %s220, %s234
      %p236 = scmp.eq.s32.totalorder %s27, 0
      %p237 = por %p235, %p236
      %s239 = sadd.s32 %s238, 1
      %p242 = scmp.eq.s32.totalorder %s21, 1
      %p243 = scmp.ne.s32.totalorder %s238, %s240
      %p244 = scmp.eq.s32.totalorder %s21, 0
      %p245 = por %p243, %p244
      %p246 = scmp.ne.s32.totalorder %s238, %s240
      %p247 = scmp.eq.s32.totalorder %s26, 1
      %p248 = por %p246, %p247
      %p249 = scmp.ne.s32.totalorder %s240, %s241
      %p250 = scmp.eq.s32.totalorder %s26, 0
      %p251 = por %p249, %p250
      %p252 = scmp.ne.s32.totalorder %s240, %s241
      %p253 = scmp.eq.s32.totalorder %s27, 1
      %p254 = por %p252, %p253
      %p256 = scmp.ne.s32.totalorder %s241, %s255
      %p257 = scmp.eq.s32.totalorder %s27, 0
      %p258 = por %p256, %p257
      %s260 = sadd.s32 %s259, 1
      %p263 = scmp.eq.s32.totalorder %s21, 1
      %p264 = scmp.ne.s32.totalorder %s259, %s261
      %p265 = scmp.eq.s32.totalorder %s21, 0
      %p266 = por %p264, %p265
      %p267 = scmp.ne.s32.totalorder %s259, %s261
      %p268 = scmp.eq.s32.totalorder %s26, 1
      %p269 = por %p267, %p268
      %p270 = scmp.ne.s32.totalorder %s261, %s262
      %p271 = scmp.eq.s32.totalorder %s26, 0
      %p272 = por %p270, %p271
      %p273 = scmp.ne.s32.totalorder %s261, %s262
      %p274 = scmp.eq.s32.totalorder %s27, 1
      %p275 = por %p273, %p274
      %p277 = scmp.ne.s32.totalorder %s262, %s276
      %p278 = scmp.eq.s32.totalorder %s27, 0
      %p279 = por %p277, %p278
      %s281 = sadd.s32 %s280, 1
      %p284 = scmp.eq.s32.totalorder %s21, 1
      %p285 = scmp.ne.s32.totalorder %s280, %s282
      %p286 = scmp.eq.s32.totalorder %s21, 0
      %p287 = por %p285, %p286
      %p288 = scmp.ne.s32.totalorder %s280, %s282
      %p289 = scmp.eq.s32.totalorder %s26, 1
      %p290 = por %p288, %p289
      %p291 = scmp.ne.s32.totalorder %s282, %s283
      %p292 = scmp.eq.s32.totalorder %s26, 0
      %p293 = por %p291, %p292
      %p294 = scmp.ne.s32.totalorder %s282, %s283
      %p295 = scmp.eq.s32.totalorder %s27, 1
      %p296 = por %p294, %p295
      %p298 = scmp.ne.s32.totalorder %s283, %s297
      %p299 = scmp.eq.s32.totalorder %s27, 0
      %p300 = por %p298, %p299
      %s301 = ssub.s32 %s21, %s28
      %p302 = scmp.eq.s32.totalorder %s301, 0
      %s304 = sadd.s32 %s303, 1
      %s305 = scalar_select %p302, %s303, %s304
      %p308 = pneg %p302
      %p309 = scmp.eq.s32.totalorder %s21, 1
      %p310 = por %p308, %p309
      %p311 = scmp.ne.s32.totalorder %s303, %s306
      %p312 = scmp.eq.s32.totalorder %s21, 0
      %p313 = por %p311, %p312
      %p314 = scmp.ne.s32.totalorder %s303, %s306
      %p315 = scmp.eq.s32.totalorder %s26, 1
      %p316 = por %p314, %p315
      %p317 = scmp.ne.s32.totalorder %s306, %s307
      %p318 = scmp.eq.s32.totalorder %s26, 0
      %p319 = por %p317, %p318
      %p320 = scmp.ne.s32.totalorder %s306, %s307
      %p321 = scmp.eq.s32.totalorder %s27, 1
      %p322 = por %p320, %p321
      %p324 = scmp.ne.s32.totalorder %s307, %s323
      %p325 = scmp.eq.s32.totalorder %s27, 0
      %p326 = por %p324, %p325
      %p327 = scmp.le.s32.totalorder 1, %s21
      %p328 = scmp.lt.s32.totalorder %s21, 3
      %p329 = pnand %p327, %p328
      %p330 = pneg %p329
      // Predicated region
      $region9: #{particlenet_forward.3} parent=5 // pred_check
        _
      $region10: #{particlenet_forward.3} parent=5 // pred_check_branch
        %332 = sbr.rel (%p329) target = $region12
      $region11: #{particlenet_forward.3} parent=5 // pred_region
        %s333 = ssub.s32 %s21, 1
        // Predicated region
        $region13: #{particlenet_forward.3} parent=11 // pred_check
          %p334 = pneg %p146
        $region14: #{particlenet_forward.3} parent=11 // pred_check_branch
          %336 = sbr.rel (%p334) target = $region16
        $region15: #{particlenet_forward.3} parent=11 // pred_region
          _
        $region16: #{particlenet_forward.3} parent=11 // pred_fallthru
          _
        // Predicated region
        $region17: #{particlenet_forward.3} parent=11 // pred_check
          %p337 = pneg %p167
        $region18: #{particlenet_forward.3} parent=11 // pred_check_branch
          %339 = sbr.rel (%p337) target = $region20
        $region19: #{particlenet_forward.3} parent=11 // pred_region
          _
        $region20: #{particlenet_forward.3} parent=11 // pred_fallthru
          _
        // Predicated region
        $region21: #{particlenet_forward.3} parent=11 // pred_check
          %p340 = pneg %p188
        $region22: #{particlenet_forward.3} parent=11 // pred_check_branch
          %342 = sbr.rel (%p340) target = $region24
        $region23: #{particlenet_forward.3} parent=11 // pred_region
          _
        $region24: #{particlenet_forward.3} parent=11 // pred_fallthru
          _
        // Predicated region
        $region25: #{particlenet_forward.3} parent=11 // pred_check
          %p343 = pneg %p209
        $region26: #{particlenet_forward.3} parent=11 // pred_check_branch
          %345 = sbr.rel (%p343) target = $region28
        $region27: #{particlenet_forward.3} parent=11 // pred_region
          _
        $region28: #{particlenet_forward.3} parent=11 // pred_fallthru
          _
        // Predicated region
        $region29: #{particlenet_forward.3} parent=11 // pred_check
          %p346 = pneg %p230
        $region30: #{particlenet_forward.3} parent=11 // pred_check_branch
          %348 = sbr.rel (%p346) target = $region32
        $region31: #{particlenet_forward.3} parent=11 // pred_region
          _
        $region32: #{particlenet_forward.3} parent=11 // pred_fallthru
          _
        // Predicated region
        $region33: #{particlenet_forward.3} parent=11 // pred_check
          %p349 = pneg %p251
        $region34: #{particlenet_forward.3} parent=11 // pred_check_branch
          %351 = sbr.rel (%p349) target = $region36
        $region35: #{particlenet_forward.3} parent=11 // pred_region
          _
        $region36: #{particlenet_forward.3} parent=11 // pred_fallthru
          _
        // Predicated region
        $region37: #{particlenet_forward.3} parent=11 // pred_check
          %p352 = pneg %p272
        $region38: #{particlenet_forward.3} parent=11 // pred_check_branch
          %354 = sbr.rel (%p352) target = $region40
        $region39: #{particlenet_forward.3} parent=11 // pred_region
          _
        $region40: #{particlenet_forward.3} parent=11 // pred_fallthru
          _
        // Predicated region
        $region41: #{particlenet_forward.3} parent=11 // pred_check
          %p355 = pneg %p293
        $region42: #{particlenet_forward.3} parent=11 // pred_check_branch
          %357 = sbr.rel (%p355) target = $region44
        $region43: #{particlenet_forward.3} parent=11 // pred_region
          _
        $region44: #{particlenet_forward.3} parent=11 // pred_fallthru
          _
      $region12: #{particlenet_forward.3} parent=5 // pred_fallthru
        _
      %p358 = scmp.lt.s32.totalorder %s21, 2
      // Predicated region
      $region45: #{particlenet_forward.3} parent=5 // pred_check
        %p359 = pneg %p358
      $region46: #{particlenet_forward.3} parent=5 // pred_check_branch
        %361 = sbr.rel (%p359) target = $region48
      $region47: #{particlenet_forward.3} parent=5 // pred_region
        // Predicated region
        $region49: #{particlenet_forward.3} parent=47 // pred_check
          %p362 = pneg %p41
        $region50: #{particlenet_forward.3} parent=47 // pred_check_branch
          %364 = sbr.rel (%p362) target = $region52
        $region51: #{particlenet_forward.3} parent=47 // pred_region
          %p365 = scmp.lt.s32.totalorder %s21, 1
          %s366 = scalar_select %p365, %s21, 1
          %s367 = smul.addr %s366, 14
          %s368 = smul.addr %s367, 4
          %s369 = scalar_lea.vmem %s0, %s368
        $region52: #{particlenet_forward.3} parent=47 // pred_fallthru
          _
        // Predicated region
        $region53: #{particlenet_forward.3} parent=47 // pred_check
          %p370 = pneg %p67
        $region54: #{particlenet_forward.3} parent=47 // pred_check_branch
          %372 = sbr.rel (%p370) target = $region56
        $region55: #{particlenet_forward.3} parent=47 // pred_region
          %s373 = smul.u32 2, %s21
          %p374 = scmp.lt.s32.totalorder %s373, 3
          %s375 = scalar_select %p374, %s373, 3
          %s376 = smul.addr %s375, 8
          %s377 = scalar_lea.vmem %s1, %s376
          %s378 = smul.u32 2, %s21
        $region56: #{particlenet_forward.3} parent=47 // pred_fallthru
          _
        // Predicated region
        $region57: #{particlenet_forward.3} parent=47 // pred_check
          %p379 = pneg %p93
        $region58: #{particlenet_forward.3} parent=47 // pred_check_branch
          %381 = sbr.rel (%p379) target = $region60
        $region59: #{particlenet_forward.3} parent=47 // pred_region
          %s382 = smul.u32 2, %s21
          %p383 = scmp.lt.s32.totalorder %s382, 3
          %s384 = scalar_select %p383, %s382, 3
          %s385 = smul.addr %s384, 8
          %s386 = scalar_lea.vmem %s2, %s385
          %s387 = smul.u32 2, %s21
        $region60: #{particlenet_forward.3} parent=47 // pred_fallthru
          _
        // Predicated region
        $region61: #{particlenet_forward.3} parent=47 // pred_check
          %p388 = pneg %p119
        $region62: #{particlenet_forward.3} parent=47 // pred_check_branch
          %390 = sbr.rel (%p388) target = $region64
        $region63: #{particlenet_forward.3} parent=47 // pred_region
          %s391 = smul.u32 2, %s21
          %p392 = scmp.lt.s32.totalorder %s391, 3
          %s393 = scalar_select %p392, %s391, 3
          %s394 = smul.addr %s393, 8
          %s395 = scalar_lea.vmem %s3, %s394
          %s396 = smul.u32 2, %s21
        $region64: #{particlenet_forward.3} parent=47 // pred_fallthru
          _
      $region48: #{particlenet_forward.3} parent=5 // pred_fallthru
        _
      %p397 = scmp.le.s32.totalorder 1, %s21
      %p398 = scmp.lt.s32.totalorder %s21, 3
      %p399 = pnand %p397, %p398
      %p400 = pneg %p399
      // Predicated region
      $region65: #{particlenet_forward.3} parent=5 // pred_check
        _
      $region66: #{particlenet_forward.3} parent=5 // pred_check_branch
        %402 = sbr.rel (%p399) target = $region68
      $region67: #{particlenet_forward.3} parent=5 // pred_region
        %s403 = ssub.s32 %s21, 1
        %p404 = scmp.lt.s32.totalorder %s26, 1
        %s405 = scalar_select %p404, %s26, 1
        %s406 = smul.addr %s405, 14
        %s407 = smul.addr %s406, 4
        %s408 = scalar_lea.vmem %s0, %s407
        %p409 = pneg %p47
        %p410 = pneg %p44
        %s411 = smul.u32 2, %s26
        %p412 = scmp.lt.s32.totalorder %s411, 3
        %s413 = scalar_select %p412, %s411, 3
        %s414 = smul.addr %s413, 8
        %s415 = scalar_lea.vmem %s1, %s414
        %p416 = pneg %p73
        %p417 = pneg %p70
        %s418 = smul.u32 2, %s26
        %p419 = scmp.lt.s32.totalorder %s418, 3
        %s420 = scalar_select %p419, %s418, 3
        %s421 = smul.addr %s420, 8
        %s422 = scalar_lea.vmem %s2, %s421
        %p423 = pneg %p99
        %p424 = pneg %p96
        %s425 = smul.u32 2, %s26
        %p426 = scmp.lt.s32.totalorder %s425, 3
        %s427 = scalar_select %p426, %s425, 3
        %s428 = smul.addr %s427, 8
        %s429 = scalar_lea.vmem %s3, %s428
        %p430 = pneg %p125
        %p431 = pneg %p122
        %p432 = pneg %p146
        %p433 = pneg %p143
        %p434 = pneg %p167
        %p435 = pneg %p164
        %p436 = pneg %p188
        %p437 = pneg %p185
        %p438 = pneg %p209
        %p439 = pneg %p206
        %p440 = pneg %p230
        %p441 = pneg %p227
        %p442 = pneg %p251
        %p443 = pneg %p248
        %p444 = pneg %p272
        %p445 = pneg %p269
        %p446 = pneg %p293
        %p447 = pneg %p290
        %p448 = pneg %p319
        %p449 = pneg %p316
        %s450 = sand.u32 %s306, 1
        %s451 = scalar_lea.sflag [#allocation3], %s450
        %s452 = sand.u32 %s306, 1
        %s453 = scalar_lea.vmem [#allocation2], %s452
        %p454 = scmp.lt.s32.totalorder %s26, 1
        %s455 = scalar_select %p454, %s26, 1
        %s456 = smul.addr %s455, 14
        %s457 = smul.addr %s456, 4
        %s458 = scalar_lea.vmem %s0, %s457
        %s459 = smul.u32 2, %s26
        %p460 = scmp.lt.s32.totalorder %s459, 3
        %s461 = scalar_select %p460, %s459, 3
        %s462 = smul.addr %s461, 8
        %s463 = scalar_lea.vmem %s1, %s462
        %s464 = smul.u32 2, %s26
        %s465 = smul.u32 2, %s26
        %p466 = scmp.lt.s32.totalorder %s465, 3
        %s467 = scalar_select %p466, %s465, 3
        %s468 = smul.addr %s467, 8
        %s469 = scalar_lea.vmem %s2, %s468
        %s470 = smul.u32 2, %s26
        %s471 = smul.u32 2, %s26
        %p472 = scmp.lt.s32.totalorder %s471, 3
        %s473 = scalar_select %p472, %s471, 3
        %s474 = smul.addr %s473, 8
        %s475 = scalar_lea.vmem %s3, %s474
        %s476 = smul.u32 2, %s26
        %v478 = vld [vmem:[%s463] sm:$0xff]
        %v479 = vld [vmem:[%s463 + $0x8] sm:$0xff]
        %v480 = vpack.c.bf16 %v479, %v478
        %v481 = vld [vmem:[%s469] sm:$0xff]
        %v482 = vld [vmem:[%s469 + $0x8] sm:$0xff]
        %v483 = vld [vmem:[%s4] sm:$0xf]
        %v484 = vld [vmem:[%s4 + $0x4] sm:$0xf]
        %v485 = vld [vmem:[%s4 + $0x8] sm:$0xf]
        %v486 = vld [vmem:[%s4 + $0xc] sm:$0xf]
        %v487 = vld [vmem:[%s5] sm:$0x1]
        %v488 = vperm.slane %v487, 0
        %v493 = vunpack.c.l.b16 %v483
        %v494 = vunpack.c.l.b16 %v484
        %v495 = vunpack.c.l.b16 %v485
        %v496 = vunpack.c.l.b16 %v486
        %v497 = vpack.c.b16 %v494, %v493
        %v498 = vpack.c.b16 %v496, %v495
        %vm501 = vcmask 261120
        %v503 = vsel %vm501, %v480, 0
        %505 = vmatpush.bf16.msra.mxu0 0
        %506 = vmatpush.bf16.msra.mxu0 0
        %507 = vmatpush.bf16.msra.mxu0 0
        %508 = vmatpush.bf16.msra.mxu0 0
        %509 = vmatpush.bf16.msra.mxu0 0
        %510 = vmatpush.bf16.msra.mxu0 0
        %511 = vmatpush.bf16.msra.mxu0 %v498
        %512 = vmatpush.bf16.msra.mxu0 %v497
        %513 = vmatmul.bf16.gmra.mxu0 %v503
        %v514 = vpop.f32.mrf.mxu0
        %v515 = vadd.f32 %v488, %v514
        %v516 = vpop.f32.mrf.mxu0
        %v517 = vadd.f32 %v488, %v516
        %518 = vdwg.mxu0
        %v519 = vld [vmem:[%s458] sm:$0xf]
        %v520 = vld [vmem:[%s458 + $0x4] sm:$0xf]
        %v521 = vld [vmem:[%s458 + $0x8] sm:$0xf]
        %v522 = vld [vmem:[%s458 + $0xc] sm:$0xf]
        %v523 = vld [vmem:[%s458 + $0x10] sm:$0xf]
        %v524 = vld [vmem:[%s458 + $0x14] sm:$0xf]
        %v525 = vld [vmem:[%s458 + $0x18] sm:$0xf]
        %v526 = vld [vmem:[%s458 + $0x1c] sm:$0xf]
        %v527 = vld [vmem:[%s458 + $0x20] sm:$0xf]
        %v528 = vld [vmem:[%s458 + $0x24] sm:$0xf]
        %v529 = vld [vmem:[%s458 + $0x28] sm:$0xf]
        %v530 = vld [vmem:[%s458 + $0x2c] sm:$0xf]
        %v531 = vld [vmem:[%s458 + $0x30] sm:$0xf]
        %v532 = vld [vmem:[%s458 + $0x34] sm:$0xf]
        %v533 = vld [vmem:[%s4 + $0x10] sm:$0xf]
        %v534 = vld [vmem:[%s4 + $0x14] sm:$0xf]
        %v535 = vld [vmem:[%s4 + $0x18] sm:$0xf]
        %v536 = vld [vmem:[%s4 + $0x1c] sm:$0xf]
        %v551 = vunpack.c.l.b16 %v519
        %v552 = vunpack.c.l.b16 %v520
        %v553 = vunpack.c.l.b16 %v521
        %v554 = vunpack.c.l.b16 %v522
        %v555 = vunpack.c.l.b16 %v523
        %v556 = vunpack.c.l.b16 %v524
        %v557 = vunpack.c.l.b16 %v525
        %v558 = vunpack.c.l.b16 %v526
        %v559 = vunpack.c.l.b16 %v527
        %v560 = vunpack.c.l.b16 %v528
        %v561 = vunpack.c.l.b16 %v529
        %v562 = vunpack.c.l.b16 %v530
        %v563 = vunpack.c.l.b16 %v531
        %v564 = vunpack.c.l.b16 %v532
        %v565 = vpack.c.b16 %v552, %v551
        %v566 = vpack.c.b16 %v554, %v553
        %v567 = vpack.c.b16 %v556, %v555
        %v568 = vpack.c.b16 %v558, %v557
        %v569 = vpack.c.b16 %v560, %v559
        %v570 = vpack.c.b16 %v562, %v561
        %v571 = vpack.c.b16 %v564, %v563
        %v576 = vunpack.c.l.b16 %v533
        %v577 = vunpack.c.l.b16 %v534
        %v578 = vunpack.c.l.b16 %v535
        %v579 = vunpack.c.l.b16 %v536
        %v580 = vpack.c.b16 %v577, %v576
        %v581 = vpack.c.b16 %v579, %v578
        %v585 = vsel %vm501, %v565, 0
        %v588 = vsel %vm501, %v566, 0
        %v591 = vsel %vm501, %v567, 0
        %v594 = vsel %vm501, %v568, 0
        %v597 = vsel %vm501, %v569, 0
        %v600 = vsel %vm501, %v570, 0
        %v603 = vsel %vm501, %v571, 0
        %605 = vmatpush.bf16.msra.mxu0 0
        %606 = vmatpush.bf16.msra.mxu0 0
        %607 = vmatpush.bf16.msra.mxu0 0
        %608 = vmatpush.bf16.msra.mxu0 0
        %609 = vmatpush.bf16.msra.mxu0 0
        %610 = vmatpush.bf16.msra.mxu0 0
        %611 = vmatpush.bf16.msra.mxu0 %v581
        %612 = vmatpush.bf16.msra.mxu0 %v580
        %613 = vmatmul.bf16.gmra.mxu0 %v585
        %v614 = vpop.f32.mrf.mxu0
        %v615 = vadd.f32 0.0, %v614
        %v616 = vpop.f32.mrf.mxu0
        %v617 = vadd.f32 0.0, %v616
        %618 = vmatmul.bf16.gmra.mxu0 %v588
        %v619 = vpop.f32.mrf.mxu0
        %v620 = vadd.f32 0.0, %v619
        %v621 = vpop.f32.mrf.mxu0
        %v622 = vadd.f32 0.0, %v621
        %623 = vmatmul.bf16.gmra.mxu0 %v591
        %v624 = vpop.f32.mrf.mxu0
        %v625 = vadd.f32 0.0, %v624
        %v626 = vpop.f32.mrf.mxu0
        %v627 = vadd.f32 0.0, %v626
        %628 = vmatmul.bf16.gmra.mxu0 %v594
        %v629 = vpop.f32.mrf.mxu0
        %v630 = vadd.f32 0.0, %v629
        %v631 = vpop.f32.mrf.mxu0
        %v632 = vadd.f32 0.0, %v631
        %633 = vmatmul.bf16.gmra.mxu0 %v597
        %v634 = vpop.f32.mrf.mxu0
        %v635 = vadd.f32 0.0, %v634
        %v636 = vpop.f32.mrf.mxu0
        %v637 = vadd.f32 0.0, %v636
        %638 = vmatmul.bf16.gmra.mxu0 %v600
        %v639 = vpop.f32.mrf.mxu0
        %v640 = vadd.f32 0.0, %v639
        %v641 = vpop.f32.mrf.mxu0
        %v642 = vadd.f32 0.0, %v641
        %643 = vmatmul.bf16.gmra.mxu0 %v603
        %v644 = vpop.f32.mrf.mxu0
        %v645 = vadd.f32 0.0, %v644
        %v646 = vpop.f32.mrf.mxu0
        %v647 = vadd.f32 0.0, %v646
        %648 = vdwg.mxu0
        %v649 = vadd.f32 %v615, %v515
        %v650 = vadd.f32 %v617, %v517
        %v651 = vadd.f32 %v620, %v515
        %v652 = vadd.f32 %v622, %v517
        %v653 = vadd.f32 %v625, %v515
        %v654 = vadd.f32 %v627, %v517
        %v655 = vadd.f32 %v630, %v515
        %v656 = vadd.f32 %v632, %v517
        %v657 = vadd.f32 %v635, %v515
        %v658 = vadd.f32 %v637, %v517
        %v659 = vadd.f32 %v640, %v515
        %v660 = vadd.f32 %v642, %v517
        %v661 = vadd.f32 %v645, %v515
        %v662 = vadd.f32 %v647, %v517
        %v663 = vmax.f32 %v649, 0.0
        %v664 = vmax.f32 %v650, 0.0
        %v665 = vmax.f32 %v651, 0.0
        %v666 = vmax.f32 %v652, 0.0
        %v667 = vmax.f32 %v653, 0.0
        %v668 = vmax.f32 %v654, 0.0
        %v669 = vmax.f32 %v655, 0.0
        %v670 = vmax.f32 %v656, 0.0
        %v671 = vmax.f32 %v657, 0.0
        %v672 = vmax.f32 %v658, 0.0
        %v673 = vmax.f32 %v659, 0.0
        %v674 = vmax.f32 %v660, 0.0
        %v675 = vmax.f32 %v661, 0.0
        %v676 = vmax.f32 %v662, 0.0
        %v677 = vpack.c.bf16 %v664, %v663
        %v678 = vpack.c.bf16 %v666, %v665
        %v679 = vpack.c.bf16 %v668, %v667
        %v680 = vpack.c.bf16 %v670, %v669
        %v681 = vpack.c.bf16 %v672, %v671
        %v682 = vpack.c.bf16 %v674, %v673
        %v683 = vpack.c.bf16 %v676, %v675
        %v684 = vld [vmem:[%s4 + $0x20] sm:$0xf]
        %v685 = vld [vmem:[%s4 + $0x24] sm:$0xf]
        %v686 = vld [vmem:[%s4 + $0x28] sm:$0xf]
        %v687 = vld [vmem:[%s4 + $0x2c] sm:$0xf]
        %v688 = vld [vmem:[%s4 + $0x30] sm:$0xf]
        %v689 = vld [vmem:[%s4 + $0x34] sm:$0xf]
        %v690 = vld [vmem:[%s4 + $0x38] sm:$0xf]
        %v691 = vld [vmem:[%s4 + $0x3c] sm:$0xf]
        %v692 = vld [vmem:[%s5 + $0x1] sm:$0x1]
        %v693 = vperm.slane %v692, 0
        %v702 = vunpack.c.l.b16 %v684
        %v703 = vunpack.c.l.b16 %v685
        %v704 = vunpack.c.l.b16 %v686
        %v705 = vunpack.c.l.b16 %v687
        %v706 = vunpack.c.l.b16 %v688
        %v707 = vunpack.c.l.b16 %v689
        %v708 = vunpack.c.l.b16 %v690
        %v709 = vunpack.c.l.b16 %v691
        %v710 = vpack.c.b16 %v703, %v702
        %v711 = vpack.c.b16 %v705, %v704
        %v712 = vpack.c.b16 %v707, %v706
        %v713 = vpack.c.b16 %v709, %v708
        %vm718 = vcmask 523264
        %v720 = vsel %vm718, %v677, 0
        %v723 = vsel %vm718, %v678, 0
        %v726 = vsel %vm718, %v679, 0
        %v729 = vsel %vm718, %v680, 0
        %v732 = vsel %vm718, %v681, 0
        %v735 = vsel %vm718, %v682, 0
        %v738 = vsel %vm718, %v683, 0
        %740 = vmatpush.bf16.msra.mxu0 0
        %741 = vmatpush.bf16.msra.mxu0 0
        %742 = vmatpush.bf16.msra.mxu0 0
        %743 = vmatpush.bf16.msra.mxu0 0
        %744 = vmatpush.bf16.msra.mxu0 %v713
        %745 = vmatpush.bf16.msra.mxu0 %v712
        %746 = vmatpush.bf16.msra.mxu0 %v711
        %747 = vmatpush.bf16.msra.mxu0 %v710
        %748 = vmatmul.bf16.gmra.mxu0 %v720
        %v749 = vpop.f32.mrf.mxu0
        %v750 = vadd.f32 %v693, %v749
        %v751 = vpop.f32.mrf.mxu0
        %v752 = vadd.f32 %v693, %v751
        %753 = vmatmul.bf16.gmra.mxu0 %v723
        %v754 = vpop.f32.mrf.mxu0
        %v755 = vadd.f32 %v693, %v754
        %v756 = vpop.f32.mrf.mxu0
        %v757 = vadd.f32 %v693, %v756
        %758 = vmatmul.bf16.gmra.mxu0 %v726
        %v759 = vpop.f32.mrf.mxu0
        %v760 = vadd.f32 %v693, %v759
        %v761 = vpop.f32.mrf.mxu0
        %v762 = vadd.f32 %v693, %v761
        %763 = vmatmul.bf16.gmra.mxu0 %v729
        %v764 = vpop.f32.mrf.mxu0
        %v765 = vadd.f32 %v693, %v764
        %v766 = vpop.f32.mrf.mxu0
        %v767 = vadd.f32 %v693, %v766
        %768 = vmatmul.bf16.gmra.mxu0 %v732
        %v769 = vpop.f32.mrf.mxu0
        %v770 = vadd.f32 %v693, %v769
        %v771 = vpop.f32.mrf.mxu0
        %v772 = vadd.f32 %v693, %v771
        %773 = vmatmul.bf16.gmra.mxu0 %v735
        %v774 = vpop.f32.mrf.mxu0
        %v775 = vadd.f32 %v693, %v774
        %v776 = vpop.f32.mrf.mxu0
        %v777 = vadd.f32 %v693, %v776
        %778 = vmatmul.bf16.gmra.mxu0 %v738
        %v779 = vpop.f32.mrf.mxu0
        %v780 = vadd.f32 %v693, %v779
        %v781 = vpop.f32.mrf.mxu0
        %v782 = vadd.f32 %v693, %v781
        %783 = vdwg.mxu0
        %v784 = vmax.f32 %v750, 0.0
        %v785 = vmax.f32 %v752, 0.0
        %v786 = vmax.f32 %v755, 0.0
        %v787 = vmax.f32 %v757, 0.0
        %v788 = vmax.f32 %v760, 0.0
        %v789 = vmax.f32 %v762, 0.0
        %v790 = vmax.f32 %v765, 0.0
        %v791 = vmax.f32 %v767, 0.0
        %v792 = vmax.f32 %v770, 0.0
        %v793 = vmax.f32 %v772, 0.0
        %v794 = vmax.f32 %v775, 0.0
        %v795 = vmax.f32 %v777, 0.0
        %v796 = vmax.f32 %v780, 0.0
        %v797 = vmax.f32 %v782, 0.0
        %v798 = vpack.c.bf16 %v785, %v784
        %v799 = vpack.c.bf16 %v787, %v786
        %v800 = vpack.c.bf16 %v789, %v788
        %v801 = vpack.c.bf16 %v791, %v790
        %v802 = vpack.c.bf16 %v793, %v792
        %v803 = vpack.c.bf16 %v795, %v794
        %v804 = vpack.c.bf16 %v797, %v796
        %v805 = vld [vmem:[%s4 + $0x40] sm:$0xf]
        %v806 = vld [vmem:[%s4 + $0x44] sm:$0xf]
        %v807 = vld [vmem:[%s4 + $0x48] sm:$0xf]
        %v808 = vld [vmem:[%s4 + $0x4c] sm:$0xf]
        %v809 = vld [vmem:[%s4 + $0x50] sm:$0xf]
        %v810 = vld [vmem:[%s4 + $0x54] sm:$0xf]
        %v811 = vld [vmem:[%s4 + $0x58] sm:$0xf]
        %v812 = vld [vmem:[%s4 + $0x5c] sm:$0xf]
        %v813 = vld [vmem:[%s5 + $0x2] sm:$0x1]
        %v814 = vperm.slane %v813, 0
        %v823 = vunpack.c.l.b16 %v805
        %v824 = vunpack.c.l.b16 %v806
        %v825 = vunpack.c.l.b16 %v807
        %v826 = vunpack.c.l.b16 %v808
        %v827 = vunpack.c.l.b16 %v809
        %v828 = vunpack.c.l.b16 %v810
        %v829 = vunpack.c.l.b16 %v811
        %v830 = vunpack.c.l.b16 %v812
        %v831 = vpack.c.b16 %v824, %v823
        %v832 = vpack.c.b16 %v826, %v825
        %v833 = vpack.c.b16 %v828, %v827
        %v834 = vpack.c.b16 %v830, %v829
        %v840 = vsel %vm718, %v798, 0
        %v843 = vsel %vm718, %v799, 0
        %v846 = vsel %vm718, %v800, 0
        %v849 = vsel %vm718, %v801, 0
        %v852 = vsel %vm718, %v802, 0
        %v855 = vsel %vm718, %v803, 0
        %v858 = vsel %vm718, %v804, 0
        %860 = vmatpush.bf16.msra.mxu0 0
        %861 = vmatpush.bf16.msra.mxu0 0
        %862 = vmatpush.bf16.msra.mxu0 0
        %863 = vmatpush.bf16.msra.mxu0 0
        %864 = vmatpush.bf16.msra.mxu0 %v834
        %865 = vmatpush.bf16.msra.mxu0 %v833
        %866 = vmatpush.bf16.msra.mxu0 %v832
        %867 = vmatpush.bf16.msra.mxu0 %v831
        %868 = vmatmul.bf16.gmra.mxu0 %v840
        %v869 = vpop.f32.mrf.mxu0
        %v870 = vadd.f32 %v814, %v869
        %v871 = vpop.f32.mrf.mxu0
        %v872 = vadd.f32 %v814, %v871
        %873 = vmatmul.bf16.gmra.mxu0 %v843
        %v874 = vpop.f32.mrf.mxu0
        %v875 = vadd.f32 %v814, %v874
        %v876 = vpop.f32.mrf.mxu0
        %v877 = vadd.f32 %v814, %v876
        %878 = vmatmul.bf16.gmra.mxu0 %v846
        %v879 = vpop.f32.mrf.mxu0
        %v880 = vadd.f32 %v814, %v879
        %v881 = vpop.f32.mrf.mxu0
        %v882 = vadd.f32 %v814, %v881
        %883 = vmatmul.bf16.gmra.mxu0 %v849
        %v884 = vpop.f32.mrf.mxu0
        %v885 = vadd.f32 %v814, %v884
        %v886 = vpop.f32.mrf.mxu0
        %v887 = vadd.f32 %v814, %v886
        %888 = vmatmul.bf16.gmra.mxu0 %v852
        %v889 = vpop.f32.mrf.mxu0
        %v890 = vadd.f32 %v814, %v889
        %v891 = vpop.f32.mrf.mxu0
        %v892 = vadd.f32 %v814, %v891
        %893 = vmatmul.bf16.gmra.mxu0 %v855
        %v894 = vpop.f32.mrf.mxu0
        %v895 = vadd.f32 %v814, %v894
        %v896 = vpop.f32.mrf.mxu0
        %v897 = vadd.f32 %v814, %v896
        %898 = vmatmul.bf16.gmra.mxu0 %v858
        %v899 = vpop.f32.mrf.mxu0
        %v900 = vadd.f32 %v814, %v899
        %v901 = vpop.f32.mrf.mxu0
        %v902 = vadd.f32 %v814, %v901
        %903 = vdwg.mxu0
        %v904 = vmax.f32 %v870, 0.0
        %v905 = vmax.f32 %v872, 0.0
        %v906 = vmax.f32 %v875, 0.0
        %v907 = vmax.f32 %v877, 0.0
        %v908 = vmax.f32 %v880, 0.0
        %v909 = vmax.f32 %v882, 0.0
        %v910 = vmax.f32 %v885, 0.0
        %v911 = vmax.f32 %v887, 0.0
        %v912 = vmax.f32 %v890, 0.0
        %v913 = vmax.f32 %v892, 0.0
        %v914 = vmax.f32 %v895, 0.0
        %v915 = vmax.f32 %v897, 0.0
        %v916 = vmax.f32 %v900, 0.0
        %v917 = vmax.f32 %v902, 0.0
        %v918 = vsel %vm718, %v904, 0.0
        %v919 = vsel %vm718, %v906, 0.0
        %v920 = vadd.f32 %v918, %v919
        %v921 = vsel %vm718, %v908, 0.0
        %v922 = vadd.f32 %v920, %v921
        %v923 = vsel %vm718, %v910, 0.0
        %v924 = vadd.f32 %v922, %v923
        %v925 = vsel %vm718, %v912, 0.0
        %v926 = vadd.f32 %v924, %v925
        %v927 = vsel %vm718, %v914, 0.0
        %v928 = vadd.f32 %v926, %v927
        %v929 = vsel %vm718, %v916, 0.0
        %v930 = vadd.f32 %v928, %v929
        %v931 = vsel %vm718, %v905, 0.0
        %v932 = vsel %vm718, %v907, 0.0
        %v933 = vadd.f32 %v931, %v932
        %v934 = vsel %vm718, %v909, 0.0
        %v935 = vadd.f32 %v933, %v934
        %v936 = vsel %vm718, %v911, 0.0
        %v937 = vadd.f32 %v935, %v936
        %v938 = vsel %vm718, %v913, 0.0
        %v939 = vadd.f32 %v937, %v938
        %v940 = vsel %vm718, %v915, 0.0
        %v941 = vadd.f32 %v939, %v940
        %v942 = vsel %vm718, %v917, 0.0
        %v943 = vadd.f32 %v941, %v942
        %v944 = vmul.f32 %v930, 0.14285715
        %v945 = vmul.f32 %v943, 0.14285715
        %948 = vrot.lane.b32.xlu0 %v944, 64
        %v949 = vpop.permute.xlu0 %948
        %950 = vrot.lane.b32.xlu0 %v945, 64
        %v951 = vpop.permute.xlu0 %950
        %v954 = vadd.f32 %v515, %v949
        %v955 = vadd.f32 %v517, %v951
        %v956 = vmax.f32 %v954, 0.0
        %v957 = vmax.f32 %v955, 0.0
        %959 = vset.pattern.permute.xlu0 0
        %960 = vperm.xlu0 %959, %v481
        %v961 = vpop.permute.xlu0 %960
        %964 = vset.pattern.permute.xlu0 0
        %965 = vperm.xlu0 %964, %v482
        %v966 = vpop.permute.xlu0 %965
        %v968 = vmul.f32 %v956, %v961
        %v969 = vmul.f32 %v957, %v966
        %v970 = vld [vmem:[%s6] sm:$0xf]
        %v971 = vld [vmem:[%s6 + $0x4] sm:$0xf]
        %v972 = vld [vmem:[%s6 + $0x8] sm:$0xf]
        %v973 = vld [vmem:[%s6 + $0xc] sm:$0xf]
        %v974 = vpack.c.bf16 %v969, %v968
        %v975 = vld [vmem:[%s6 + $0x10] sm:$0xf]
        %v976 = vld [vmem:[%s6 + $0x14] sm:$0xf]
        %v977 = vld [vmem:[%s6 + $0x18] sm:$0xf]
        %v978 = vld [vmem:[%s6 + $0x1c] sm:$0xf]
        %v979 = vld [vmem:[%s6 + $0x20] sm:$0xf]
        %v980 = vld [vmem:[%s6 + $0x24] sm:$0xf]
        %v981 = vld [vmem:[%s6 + $0x28] sm:$0xf]
        %v982 = vld [vmem:[%s6 + $0x2c] sm:$0xf]
        %984 = vrot.lane.b32.xlu0 %v974, 64
        %v985 = vpop.permute.xlu0 %984
        %v994 = vunpack.c.l.b16 %v975
        %v995 = vunpack.c.l.b16 %v976
        %v996 = vunpack.c.l.b16 %v977
        %v997 = vunpack.c.l.b16 %v978
        %v998 = vunpack.c.l.b16 %v979
        %v999 = vunpack.c.l.b16 %v980
        %v1000 = vunpack.c.l.b16 %v981
        %v1001 = vunpack.c.l.b16 %v982
        %v1002 = vpack.c.b16 %v995, %v994
        %v1003 = vpack.c.b16 %v997, %v996
        %v1004 = vpack.c.b16 %v999, %v998
        %v1005 = vpack.c.b16 %v1001, %v1000
        %v1011 = vsel %vm718, %v985, 0
        %1013 = vmatpush.bf16.msra.mxu0 0
        %1014 = vmatpush.bf16.msra.mxu0 0
        %1015 = vmatpush.bf16.msra.mxu0 0
        %1016 = vmatpush.bf16.msra.mxu0 0
        %1017 = vmatpush.bf16.msra.mxu0 %v1005
        %1018 = vmatpush.bf16.msra.mxu0 %v1004
        %1019 = vmatpush.bf16.msra.mxu0 %v1003
        %1020 = vmatpush.bf16.msra.mxu0 %v1002
        %1021 = vmatmul.bf16.gmra.mxu0 %v1011
        %v1022 = vpop.f32.mrf.mxu0
        %v1023 = vadd.f32 0.0, %v1022
        %v1024 = vpop.f32.mrf.mxu0
        %v1025 = vadd.f32 0.0, %v1024
        %1026 = vdwg.mxu0
        %v1031 = vunpack.c.l.b16 %v970
        %v1032 = vunpack.c.l.b16 %v971
        %v1033 = vunpack.c.l.b16 %v972
        %v1034 = vunpack.c.l.b16 %v973
        %v1035 = vpack.c.b16 %v1032, %v1031
        %v1036 = vpack.c.b16 %v1034, %v1033
        %1039 = vmatpush.bf16.msra.mxu0 0
        %1040 = vmatpush.bf16.msra.mxu0 0
        %1041 = vmatpush.bf16.msra.mxu0 0
        %1042 = vmatpush.bf16.msra.mxu0 0
        %1043 = vmatpush.bf16.msra.mxu0 0
        %1044 = vmatpush.bf16.msra.mxu0 0
        %1045 = vmatpush.bf16.msra.mxu0 %v1036
        %1046 = vmatpush.bf16.msra.mxu0 %v1035
        %1047 = vmatmul.bf16.gmra.mxu0 %v503
        %v1048 = vpop.f32.mrf.mxu0
        %v1049 = vadd.f32 %v1023, %v1048
        %v1050 = vpop.f32.mrf.mxu0
        %v1051 = vadd.f32 %v1025, %v1050
        %1052 = vdwg.mxu0
        %v1053 = vld [vmem:[%s7] sm:$0x1]
        %v1055 = vperm.slane %v1053, 0
        %v1057 = vadd.f32 %v1049, %v1055
        %v1058 = vadd.f32 %v1051, %v1055
        %v1059 = vmax.f32 %v1057, 0.0
        %v1060 = vmax.f32 %v1058, 0.0
        %v1061 = vld [vmem:[%s475] sm:$0xff]
        %v1062 = vld [vmem:[%s475 + $0x8] sm:$0xff]
        %1064 = vset.pattern.permute.xlu0 0
        %1065 = vperm.xlu0 %1064, %v1061
        %v1066 = vpop.permute.xlu0 %1065
        %1069 = vset.pattern.permute.xlu0 0
        %1070 = vperm.xlu0 %1069, %v1062
        %v1071 = vpop.permute.xlu0 %1070
        %v1073 = vmul.f32 %v1059, %v1066
        %v1074 = vmul.f32 %v1060, %v1071
        %v1075 = vadd.f32 %v1073, %v1074
        %v1076 = vrot.slane %v1075, 4
        %v1077 = vadd.f32 %v1075, %v1076
        %v1078 = vrot.slane %v1077, 2
        %v1079 = vadd.f32 %v1077, %v1078
        %v1080 = vrot.slane %v1079, 1
        %v1081 = vadd.f32 %v1079, %v1080
        %v1082 = vpack.c.bf16 %v1081, %v1081
        %v1083 = vld [vmem:[%s8] sm:$0xf]
        %v1084 = vld [vmem:[%s8 + $0x4] sm:$0xf]
        %v1085 = vld [vmem:[%s8 + $0x8] sm:$0xf]
        %v1086 = vld [vmem:[%s8 + $0xc] sm:$0xf]
        %v1087 = vld [vmem:[%s8 + $0x10] sm:$0xf]
        %v1088 = vld [vmem:[%s8 + $0x14] sm:$0xf]
        %v1089 = vld [vmem:[%s8 + $0x18] sm:$0xf]
        %v1090 = vld [vmem:[%s8 + $0x1c] sm:$0xf]
        %v1091 = vld [vmem:[%s8 + $0x20] sm:$0xf]
        %v1092 = vld [vmem:[%s8 + $0x24] sm:$0xf]
        %v1093 = vld [vmem:[%s8 + $0x28] sm:$0xf]
        %v1094 = vld [vmem:[%s8 + $0x2c] sm:$0xf]
        %v1095 = vld [vmem:[%s8 + $0x30] sm:$0xf]
        %v1096 = vld [vmem:[%s8 + $0x34] sm:$0xf]
        %v1097 = vld [vmem:[%s8 + $0x38] sm:$0xf]
        %v1098 = vld [vmem:[%s8 + $0x3c] sm:$0xf]
        %v1099 = vld [vmem:[%s9] sm:$0x1]
        %v1116 = vunpack.c.l.b16 %v1083
        %v1117 = vunpack.c.l.b16 %v1084
        %v1118 = vunpack.c.l.b16 %v1085
        %v1119 = vunpack.c.l.b16 %v1086
        %v1120 = vunpack.c.l.b16 %v1087
        %v1121 = vunpack.c.l.b16 %v1088
        %v1122 = vunpack.c.l.b16 %v1089
        %v1123 = vunpack.c.l.b16 %v1090
        %v1124 = vunpack.c.l.b16 %v1091
        %v1125 = vunpack.c.l.b16 %v1092
        %v1126 = vunpack.c.l.b16 %v1093
        %v1127 = vunpack.c.l.b16 %v1094
        %v1128 = vunpack.c.l.b16 %v1095
        %v1129 = vunpack.c.l.b16 %v1096
        %v1130 = vunpack.c.l.b16 %v1097
        %v1131 = vunpack.c.l.b16 %v1098
        %v1132 = vpack.c.b16 %v1117, %v1116
        %v1133 = vpack.c.b16 %v1119, %v1118
        %v1134 = vpack.c.b16 %v1121, %v1120
        %v1135 = vpack.c.b16 %v1123, %v1122
        %v1136 = vpack.c.b16 %v1125, %v1124
        %v1137 = vpack.c.b16 %v1127, %v1126
        %v1138 = vpack.c.b16 %v1129, %v1128
        %v1139 = vpack.c.b16 %v1131, %v1130
        %1148 = vmatpush.bf16.msra.mxu0 %v1139
        %1149 = vmatpush.bf16.msra.mxu0 %v1138
        %1150 = vmatpush.bf16.msra.mxu0 %v1137
        %1151 = vmatpush.bf16.msra.mxu0 %v1136
        %1152 = vmatpush.bf16.msra.mxu0 %v1135
        %1153 = vmatpush.bf16.msra.mxu0 %v1134
        %1154 = vmatpush.bf16.msra.mxu0 %v1133
        %1155 = vmatpush.bf16.msra.mxu0 %v1132
        %1156 = vmatmul.bf16.gmra.mxu0 %v1082
        %v1157 = vpop.f32.mrf.mxu0
        %v1158 = vadd.f32 %v1099, %v1157
        %v1159 = vpop.f32.mrf.mxu0
        %1160 = vdwg.mxu0
        %v1161 = vmax.f32 %v1158, 0.0
        %v1162 = vpack.c.bf16 %v1161, %v1161
        %v1163 = vld [vmem:[%s10] sm:$0xf]
        %v1164 = vld [vmem:[%s10 + $0x4] sm:$0xf]
        %v1165 = vld [vmem:[%s10 + $0x8] sm:$0xf]
        %v1166 = vld [vmem:[%s10 + $0xc] sm:$0xf]
        %v1167 = vld [vmem:[%s10 + $0x10] sm:$0xf]
        %v1168 = vld [vmem:[%s10 + $0x14] sm:$0xf]
        %v1169 = vld [vmem:[%s10 + $0x18] sm:$0xf]
        %v1170 = vld [vmem:[%s10 + $0x1c] sm:$0xf]
        %v1171 = vld [vmem:[%s10 + $0x20] sm:$0xf]
        %v1172 = vld [vmem:[%s10 + $0x24] sm:$0xf]
        %v1173 = vld [vmem:[%s10 + $0x28] sm:$0xf]
        %v1174 = vld [vmem:[%s10 + $0x2c] sm:$0xf]
        %v1175 = vld [vmem:[%s10 + $0x30] sm:$0xf]
        %v1176 = vld [vmem:[%s10 + $0x34] sm:$0xf]
        %v1177 = vld [vmem:[%s10 + $0x38] sm:$0xf]
        %v1178 = vld [vmem:[%s10 + $0x3c] sm:$0xf]
        %v1179 = vld [vmem:[%s11] sm:$0x1]
        %v1196 = vunpack.c.l.b16 %v1163
        %v1197 = vunpack.c.l.b16 %v1164
        %v1198 = vunpack.c.l.b16 %v1165
        %v1199 = vunpack.c.l.b16 %v1166
        %v1200 = vunpack.c.l.b16 %v1167
        %v1201 = vunpack.c.l.b16 %v1168
        %v1202 = vunpack.c.l.b16 %v1169
        %v1203 = vunpack.c.l.b16 %v1170
        %v1204 = vunpack.c.l.b16 %v1171
        %v1205 = vunpack.c.l.b16 %v1172
        %v1206 = vunpack.c.l.b16 %v1173
        %v1207 = vunpack.c.l.b16 %v1174
        %v1208 = vunpack.c.l.b16 %v1175
        %v1209 = vunpack.c.l.b16 %v1176
        %v1210 = vunpack.c.l.b16 %v1177
        %v1211 = vunpack.c.l.b16 %v1178
        %v1212 = vpack.c.b16 %v1197, %v1196
        %v1213 = vpack.c.b16 %v1199, %v1198
        %v1214 = vpack.c.b16 %v1201, %v1200
        %v1215 = vpack.c.b16 %v1203, %v1202
        %v1216 = vpack.c.b16 %v1205, %v1204
        %v1217 = vpack.c.b16 %v1207, %v1206
        %v1218 = vpack.c.b16 %v1209, %v1208
        %v1219 = vpack.c.b16 %v1211, %v1210
        %1228 = vmatpush.bf16.msra.mxu0 %v1219
        %1229 = vmatpush.bf16.msra.mxu0 %v1218
        %1230 = vmatpush.bf16.msra.mxu0 %v1217
        %1231 = vmatpush.bf16.msra.mxu0 %v1216
        %1232 = vmatpush.bf16.msra.mxu0 %v1215
        %1233 = vmatpush.bf16.msra.mxu0 %v1214
        %1234 = vmatpush.bf16.msra.mxu0 %v1213
        %1235 = vmatpush.bf16.msra.mxu0 %v1212
        %1236 = vmatmul.bf16.gmra.mxu0 %v1162
        %v1237 = vpop.f32.mrf.mxu0
        %v1238 = vadd.f32 %v1179, %v1237
        %v1239 = vpop.f32.mrf.mxu0
        %1240 = vdwg.mxu0
        %vm1241 = vcmask 32768
        %1242 = vst.msk [vmem:[%s453] sm:$0x1] %vm1241, %v1238
        %s1243 = sand.u32 %s306, 1
        %s1244 = scalar_lea.sflag [#allocation3], %s1243
        %s1245 = sand.u32 %s306, 1
        %s1246 = scalar_lea.vmem [#allocation2], %s1245
        // Predicated region
        $region69: #{particlenet_forward.3} parent=67 // pred_check
          %p1247 = pneg %p316
        $region70: #{particlenet_forward.3} parent=67 // pred_check_branch
          %1249 = sbr.rel (%p1247) target = $region72
        $region71: #{particlenet_forward.3} parent=67 // pred_region
          %1251 = vsyncadd %s1244, 0
          %s1252 = scalar_lea.hbm %s12, %s26
          %s1254 = sshll.u32 %s1246, 4
          %s1255 = int_to_ptr.vmem [resolvable:$true] %s1254
          %s1256 = sshll.u32 %s1252, 4
          %s1257 = int_to_ptr.hbm [resolvable:$true] %s1256
          %1259 = dma.vmem_to_hbm [thread:$0]  %s1255, 16, %s1257, %s1244
        $region72: #{particlenet_forward.3} parent=67 // pred_fallthru
          _
      $region68: #{particlenet_forward.3} parent=5 // pred_fallthru
        _
      %p1260 = scmp.le.s32.totalorder 2, %s21
      // Predicated region
      $region73: #{particlenet_forward.3} parent=5 // pred_check
        %p1261 = pneg %p1260
      $region74: #{particlenet_forward.3} parent=5 // pred_check_branch
        %1263 = sbr.rel (%p1261) target = $region76
      $region75: #{particlenet_forward.3} parent=5 // pred_region
        %s1264 = ssub.s32 %s21, 2
        // Predicated region
        $region77: #{particlenet_forward.3} parent=75 // pred_check
          %p1265 = pneg %p322
        $region78: #{particlenet_forward.3} parent=75 // pred_check_branch
          %1267 = sbr.rel (%p1265) target = $region80
        $region79: #{particlenet_forward.3} parent=75 // pred_region
          %s1268 = sand.u32 %s307, 1
          %s1269 = scalar_lea.sflag [#allocation3], %s1268
          %s1270 = sand.u32 %s307, 1
          %s1271 = scalar_lea.vmem [#allocation2], %s1270
          %1273 = dma.done %s1269, 16
        $region80: #{particlenet_forward.3} parent=75 // pred_fallthru
          _
      $region76: #{particlenet_forward.3} parent=5 // pred_fallthru
        _
    $region6: #{particlenet_forward.3} parent=1 // loop_footer
      %s25 = sadd.s32 1, %s21
    $region7: #{particlenet_forward.3} parent=1 // loop_footer_branch
      %20 = sbr.rel target = $region3
    $region8: #{particlenet_forward.3} parent=1 // loop_exit
      _
    %1274 = vsyncpa [#allocation3], 1
    %s1275 = scalar_lea.sflag [#allocation3], 1
    %1276 = vsyncpa %s1275, 1

</llo_original>
